<compile_context>
chip_gen: v7x
topology: tpu7x:2x2x1
jax: 0.10.0
libtpu: 0.0.40
codegen_flags: <defaults>
</compile_context>

<pallas_src>
import functools

import jax
import jax.numpy as jnp
from jax import lax
from jax.experimental import pallas as pl
from jax.experimental.pallas import tpu as pltpu


# ----------------------------- kernel -------------------------------------
def _layernorm(h, gamma, beta, eps=1e-5):
    mu = jnp.mean(h, axis=-1, keepdims=True)
    var = jnp.mean((h - mu) ** 2, axis=-1, keepdims=True)
    return (h - mu) * lax.rsqrt(var + eps) * gamma + beta


def block_kernel(x_ref,
                 wqkv_ref, bqkv_ref,            # (3H, E, D), (3H, 1, D)
                 wo_ref, bo_ref,                # (H, D, E),  (1, E)
                 g1_ref, be1_ref, g2_ref, be2_ref,
                 w1_ref, b1_ref, w2_ref, b2_ref,
                 o_ref,
                 *, n_heads, head_size):
    BB, T, E = x_ref.shape          # batch tile, sequence, embedding
    H, D = n_heads, head_size
    M = BB * T                      # all rows folded into the matmul M dim
    G = H * BB                      # (head, batch) groups for attention

    # Fold batch rows into M (last dim unchanged -> layout-free reshape).
    x = x_ref[...].reshape(M, E)

    # ---- x = norm1(x) ----
    h = _layernorm(x, g1_ref[...], be1_ref[...])

    # ---- stacked head-batched QKV projection (single batched MXU contraction)
    hb = jnp.broadcast_to(h[None], (3 * H, M, E))
    qkv = jnp.einsum('gme,ged->gmd', hb, wqkv_ref[...],
                     preferred_element_type=jnp.float32) + bqkv_ref[...]

    # (H, BB*T, D) -> (H*BB, T, D): split second-minor at the sublane tile
    # boundary, merge leading dims -- both layout-free.
    def to_groups(a):
        return a.reshape(H, BB, T, D).reshape(G, T, D)

    scale = jnp.float32(head_size ** -0.5)
    qg = to_groups(qkv[0:H]) * scale          # scale q (smaller than scores)
    kg = to_groups(qkv[H:2 * H])
    vg = to_groups(qkv[2 * H:3 * H])

    # ---- attention: batched contractions over all (batch, head) groups ----
    s = jnp.einsum('gtd,gsd->gts', qg, kg, preferred_element_type=jnp.float32)

    row = lax.broadcasted_iota(jnp.int32, (T, T), 0)
    col = lax.broadcasted_iota(jnp.int32, (T, T), 1)
    s = jnp.where((col <= row)[None], s, -1e30)   # finite mask value (NaN-safe)

    s = s - jnp.max(s, axis=-1, keepdims=True)
    p = jnp.exp(s)
    p = p * pl.reciprocal(jnp.sum(p, axis=-1, keepdims=True), approx=True)

    og = jnp.einsum('gts,gsd->gtd', p, vg, preferred_element_type=jnp.float32)

    # ---- output projection: concat(heads) @ Wo == sum_h head_h @ Wo_h ----
    oh = og.reshape(H, BB, T, D).reshape(H, M, D)
    mha = jnp.einsum('hmd,hde->hme', oh, wo_ref[...],
                     preferred_element_type=jnp.float32)
    mha = jnp.sum(mha, axis=0) + bo_ref[...]

    # ---- residual (against the normed activations, as in the reference) ----
    x1 = h + mha
    h2 = _layernorm(x1, g2_ref[...], be2_ref[...])

    # ---- feed-forward ----
    ff1 = jnp.maximum(
        jnp.dot(h2, w1_ref[...], preferred_element_type=jnp.float32) + b1_ref[...],
        0.0)
    ff2 = jnp.dot(ff1, w2_ref[...], preferred_element_type=jnp.float32) + b2_ref[...]

    o_ref[...] = (h2 + ff2).reshape(BB, T, E)


# ----------------------------- wrapper -------------------------------------
def _pick_batch_block(B, T, target_rows=256):
    divisors = [d for d in range(1, B + 1) if B % d == 0]
    best = 1
    for d in divisors:                       # biggest tile within row budget
        if d * T <= target_rows:
            best = d
    if B // best < 2:                        # give the 2nd TensorCore work (v7x)
        for d in reversed(divisors):
            if d < best and B // d >= 2:
                best = d
                break
    return best


def block_forward(x, params, *, n_heads, head_size, batch_block=None):
    B, T, E = x.shape
    H, D = n_heads, head_size

    if batch_block is None:
        batch_block = _pick_batch_block(B, T)
    assert B % batch_block == 0
    nb = B // batch_block

    # Head-major weight layouts (pure JAX, computed once outside the kernel) so
    # the kernel never has to split the embedding (lane) dim into heads.
    def head_major(w):
        return w.reshape(E, H, D).transpose(1, 0, 2)          # (H, E, D)

    wqkv = jnp.concatenate(
        [head_major(params["wq"]), head_major(params["wk"]),
         head_major(params["wv"])], axis=0)                    # (3H, E, D)
    bqkv = jnp.concatenate(
        [params["bq"].reshape(H, 1, D), params["bk"].reshape(H, 1, D),
         params["bv"].reshape(H, 1, D)], axis=0)               # (3H, 1, D)
    wo_h = params["wo"].reshape(H, D, E)                       # (H, D, E)

    weight_args = [wqkv, bqkv, wo_h, params["bo"],
                   params["g1"], params["be1"], params["g2"], params["be2"],
                   params["w1"], params["b1"], params["w2"], params["b2"]]

    def const_spec(a):
        n = a.ndim
        return pl.BlockSpec(a.shape, lambda b, n=n: (0,) * n)

    weight_specs = [const_spec(a) for a in weight_args]

    kernel = functools.partial(block_kernel, n_heads=n_heads, head_size=head_size)

    return pl.pallas_call(
        kernel,
        out_shape=jax.ShapeDtypeStruct((B, T, E), jnp.float32),
        grid=(nb,),
        in_specs=[pl.BlockSpec((batch_block, T, E), lambda b: (b, 0, 0))]
                 + weight_specs,
        out_specs=pl.BlockSpec((batch_block, T, E), lambda b: (b, 0, 0)),
        compiler_params=pltpu.CompilerParams(dimension_semantics=("parallel",)),
    )(x, *weight_args)


# -------------------------- pure-JAX reference ------------------------------
def block_reference(x, params, *, n_heads, head_size):
    def ln(h, g, b):
        mu = jnp.mean(h, axis=-1, keepdims=True)
        var = jnp.mean((h - mu) ** 2, axis=-1, keepdims=True)
        return (h - mu) / jnp.sqrt(var + 1e-5) * g + b

    h = ln(x, params["g1"], params["be1"])
    q = h @ params["wq"] + params["bq"]
    k = h @ params["wk"] + params["bk"]
    v = h @ params["wv"] + params["bv"]
    B, T, E = x.shape
    outs = []
    mask = jnp.tril(jnp.ones((T, T)))
    for hi in range(n_heads):
        lo = hi * head_size
        qh, kh, vh = (a[..., lo:lo + head_size] for a in (q, k, v))
        s = qh @ jnp.swapaxes(kh, -2, -1) * head_size ** (-0.5)
        s = jnp.where(mask == 0, -jnp.inf, s)
        p = jax.nn.softmax(s, axis=-1)
        outs.append(p @ vh)
    att = jnp.concatenate(outs, axis=-1)
    mha = att @ params["wo"] + params["bo"]
    x1 = h + mha
    h2 = ln(x1, params["g2"], params["be2"])
    ff = jnp.maximum(h2 @ params["w1"] + params["b1"], 0.0) @ params["w2"] + params["b2"]
    return h2 + ff


# ------------------------------- main ---------------------------------------
if __name__ == "__main__":
    # Small config consistent with the module.
    B, T = 2, 8            # batch, sequence (= block_size, required by the causal mask)
    n_embed, n_heads = 32, 4
    head_size = n_embed // n_heads

    key = jax.random.PRNGKey(0)
    keys = jax.random.split(key, 16)

    def init(k, shape, scale=0.02):
        return (scale * jax.random.normal(k, shape)).astype(jnp.float32)

    # Weights stored as (in, out) so the kernel computes x @ W + b
    # (equivalent to PyTorch's x @ W.T + b with W of shape (out, in)).
    params = {
        "wq": init(keys[0], (n_embed, n_embed)), "bq": init(keys[1], (1, n_embed)),
        "wk": init(keys[2], (n_embed, n_embed)), "bk": init(keys[3], (1, n_embed)),
        "wv": init(keys[4], (n_embed, n_embed)), "bv": init(keys[5], (1, n_embed)),
        "wo": init(keys[6], (n_embed, n_embed)), "bo": init(keys[7], (1, n_embed)),
        "w1": init(keys[8], (n_embed, 4 * n_embed)), "b1": init(keys[9], (1, 4 * n_embed)),
        "w2": init(keys[10], (4 * n_embed, n_embed)), "b2": init(keys[11], (1, n_embed)),
        "g1": jnp.ones((1, n_embed), jnp.float32), "be1": jnp.zeros((1, n_embed), jnp.float32),
        "g2": jnp.ones((1, n_embed), jnp.float32), "be2": jnp.zeros((1, n_embed), jnp.float32),
    }

    x = jax.random.normal(keys[12], (B, T, n_embed), dtype=jnp.float32)

    out = block_forward(x, params, n_heads=n_heads, head_size=head_size)
    out = jax.block_until_ready(out)

    ref = block_reference(x, params, n_heads=n_heads, head_size=head_size)
    assert jnp.allclose(out, ref, atol=1e-3, rtol=1e-3), "mismatch vs reference"

    # TODO(synk): dropout layers are treated as identity (eval mode / p=0).
    print("KERNEL_OK")
</pallas_src>

<mosaic_0001>
module attributes {stable_mosaic.version = 11 : i64} {
  func.func @block_kernel(%arg0: i32, %arg1: memref<1x8x32xf32, #tpu.memory_space<vmem>>, %arg2: memref<12x32x8xf32, #tpu.memory_space<vmem>>, %arg3: memref<12x1x8xf32, #tpu.memory_space<vmem>>, %arg4: memref<4x8x32xf32, #tpu.memory_space<vmem>>, %arg5: memref<1x32xf32, #tpu.memory_space<vmem>>, %arg6: memref<1x32xf32, #tpu.memory_space<vmem>>, %arg7: memref<1x32xf32, #tpu.memory_space<vmem>>, %arg8: memref<1x32xf32, #tpu.memory_space<vmem>>, %arg9: memref<1x32xf32, #tpu.memory_space<vmem>>, %arg10: memref<32x128xf32, #tpu.memory_space<vmem>>, %arg11: memref<1x128xf32, #tpu.memory_space<vmem>>, %arg12: memref<128x32xf32, #tpu.memory_space<vmem>>, %arg13: memref<1x32xf32, #tpu.memory_space<vmem>>, %arg14: memref<1x8x32xf32, #tpu.memory_space<vmem>>) attributes {dimension_semantics = [#tpu.dimension_semantics<parallel>], iteration_bounds = array<i64: 2>, scalar_prefetch = 0 : i64, scratch_operands = 0 : i64, tpu.core_type = #tpu.core_type<tc>, window_params = [{transform_indices = @transform_0, window_bounds = array<i64: 1, 8, 32>}, {pipeline_mode = #tpu.pipeline_mode<synchronous>, transform_indices = @transform_1, window_bounds = array<i64: 12, 32, 8>}, {pipeline_mode = #tpu.pipeline_mode<synchronous>, transform_indices = @transform_2, window_bounds = array<i64: 12, 1, 8>}, {pipeline_mode = #tpu.pipeline_mode<synchronous>, transform_indices = @transform_3, window_bounds = array<i64: 4, 8, 32>}, {pipeline_mode = #tpu.pipeline_mode<synchronous>, transform_indices = @transform_4, window_bounds = array<i64: 1, 32>}, {pipeline_mode = #tpu.pipeline_mode<synchronous>, transform_indices = @transform_5, window_bounds = array<i64: 1, 32>}, {pipeline_mode = #tpu.pipeline_mode<synchronous>, transform_indices = @transform_6, window_bounds = array<i64: 1, 32>}, {pipeline_mode = #tpu.pipeline_mode<synchronous>, transform_indices = @transform_7, window_bounds = array<i64: 1, 32>}, {pipeline_mode = #tpu.pipeline_mode<synchronous>, transform_indices = @transform_8, window_bounds = array<i64: 1, 32>}, {pipeline_mode = #tpu.pipeline_mode<synchronous>, transform_indices = @transform_9, window_bounds = array<i64: 32, 128>}, {pipeline_mode = #tpu.pipeline_mode<synchronous>, transform_indices = @transform_10, window_bounds = array<i64: 1, 128>}, {pipeline_mode = #tpu.pipeline_mode<synchronous>, transform_indices = @transform_11, window_bounds = array<i64: 128, 32>}, {pipeline_mode = #tpu.pipeline_mode<synchronous>, transform_indices = @transform_12, window_bounds = array<i64: 1, 32>}, {transform_indices = @transform_13, window_bounds = array<i64: 1, 8, 32>}]} {
    %c0 = arith.constant 0 : index
    %c0_0 = arith.constant 0 : index
    %c0_1 = arith.constant 0 : index
    %0 = vector.load %arg1[%c0, %c0_0, %c0_1] : memref<1x8x32xf32, #tpu.memory_space<vmem>>, vector<1x8x32xf32>
    %1 = vector.shape_cast %0 : vector<1x8x32xf32> to vector<8x32xf32>
    %c0_2 = arith.constant 0 : index
    %c0_3 = arith.constant 0 : index
    %2 = vector.load %arg6[%c0_2, %c0_3] : memref<1x32xf32, #tpu.memory_space<vmem>>, vector<1x32xf32>
    %c0_4 = arith.constant 0 : index
    %c0_5 = arith.constant 0 : index
    %3 = vector.load %arg7[%c0_4, %c0_5] : memref<1x32xf32, #tpu.memory_space<vmem>>, vector<1x32xf32>
    %cst = arith.constant dense<0.000000e+00> : vector<8xf32>
    %4 = vector.multi_reduction <add>, %1, %cst [1] : vector<8x32xf32> to vector<8xf32>
    %5 = vector.shape_cast %4 : vector<8xf32> to vector<8x1xf32>
    %cst_6 = arith.constant 3.200000e+01 : f32
    %6 = vector.broadcast %cst_6 : f32 to vector<8x1xf32>
    %7 = arith.divf %5, %6 : vector<8x1xf32>
    %8 = vector.broadcast %7 : vector<8x1xf32> to vector<8x32xf32>
    %9 = arith.subf %1, %8 : vector<8x32xf32>
    %10 = arith.mulf %9, %9 : vector<8x32xf32>
    %cst_7 = arith.constant dense<0.000000e+00> : vector<8xf32>
    %11 = vector.multi_reduction <add>, %10, %cst_7 [1] : vector<8x32xf32> to vector<8xf32>
    %12 = vector.shape_cast %11 : vector<8xf32> to vector<8x1xf32>
    %cst_8 = arith.constant 3.200000e+01 : f32
    %13 = vector.broadcast %cst_8 : f32 to vector<8x1xf32>
    %14 = arith.divf %12, %13 : vector<8x1xf32>
    %15 = vector.broadcast %7 : vector<8x1xf32> to vector<8x32xf32>
    %16 = arith.subf %1, %15 : vector<8x32xf32>
    %cst_9 = arith.constant 9.99999974E-6 : f32
    %17 = vector.broadcast %cst_9 : f32 to vector<8x1xf32>
    %18 = arith.addf %14, %17 : vector<8x1xf32>
    %19 = math.rsqrt %18 : vector<8x1xf32>
    %20 = vector.broadcast %19 : vector<8x1xf32> to vector<8x32xf32>
    %21 = arith.mulf %16, %20 : vector<8x32xf32>
    %22 = vector.broadcast %2 : vector<1x32xf32> to vector<8x32xf32>
    %23 = arith.mulf %21, %22 : vector<8x32xf32>
    %24 = vector.broadcast %3 : vector<1x32xf32> to vector<8x32xf32>
    %25 = arith.addf %23, %24 : vector<8x32xf32>
    %26 = vector.shape_cast %25 : vector<8x32xf32> to vector<1x8x32xf32>
    %27 = vector.shape_cast %26 : vector<1x8x32xf32> to vector<1x8x32xf32>
    %28 = vector.broadcast %27 : vector<1x8x32xf32> to vector<12x8x32xf32>
    %c0_10 = arith.constant 0 : index
    %c0_11 = arith.constant 0 : index
    %c0_12 = arith.constant 0 : index
    %29 = vector.load %arg2[%c0_10, %c0_11, %c0_12] : memref<12x32x8xf32, #tpu.memory_space<vmem>>, vector<12x32x8xf32>
    "tpu.trace_start"() <{level = 10 : i32, message = "gme,ged->gmd"}> : () -> ()
    %cst_13 = arith.constant dense<0.000000e+00> : vector<12x8x8xf32>
    %30 = tpu.matmul %28, %29, %cst_13 {dimension_numbers = #tpu.dot_dimension_numbers<[2], [1], [1], [2], [0, 0, 0, 1, 1, 2], [0], [0]>} : vector<12x8x32xf32>, vector<12x32x8xf32>, vector<12x8x8xf32> -> vector<12x8x8xf32>
    "tpu.trace_stop"() : () -> ()
    %c0_14 = arith.constant 0 : index
    %c0_15 = arith.constant 0 : index
    %c0_16 = arith.constant 0 : index
    %31 = vector.load %arg3[%c0_14, %c0_15, %c0_16] : memref<12x1x8xf32, #tpu.memory_space<vmem>>, vector<12x1x8xf32>
    %32 = vector.broadcast %31 : vector<12x1x8xf32> to vector<12x8x8xf32>
    %33 = arith.addf %30, %32 : vector<12x8x8xf32>
    %34 = vector.extract_strided_slice %33 {offsets = [0, 0, 0], sizes = [4, 8, 8], strides = [1, 1, 1]} : vector<12x8x8xf32> to vector<4x8x8xf32>
    %35 = vector.shape_cast %34 : vector<4x8x8xf32> to vector<4x1x8x8xf32>
    %36 = vector.shape_cast %35 : vector<4x1x8x8xf32> to vector<4x8x8xf32>
    %cst_17 = arith.constant 0.353553385 : f32
    %37 = vector.broadcast %cst_17 : f32 to vector<4x8x8xf32>
    %38 = arith.mulf %36, %37 : vector<4x8x8xf32>
    %39 = vector.extract_strided_slice %33 {offsets = [4, 0, 0], sizes = [4, 8, 8], strides = [1, 1, 1]} : vector<12x8x8xf32> to vector<4x8x8xf32>
    %40 = vector.shape_cast %39 : vector<4x8x8xf32> to vector<4x1x8x8xf32>
    %41 = vector.shape_cast %40 : vector<4x1x8x8xf32> to vector<4x8x8xf32>
    %42 = vector.extract_strided_slice %33 {offsets = [8, 0, 0], sizes = [4, 8, 8], strides = [1, 1, 1]} : vector<12x8x8xf32> to vector<4x8x8xf32>
    %43 = vector.shape_cast %42 : vector<4x8x8xf32> to vector<4x1x8x8xf32>
    %44 = vector.shape_cast %43 : vector<4x1x8x8xf32> to vector<4x8x8xf32>
    "tpu.trace_start"() <{level = 10 : i32, message = "gtd,gsd->gts"}> : () -> ()
    %cst_18 = arith.constant dense<0.000000e+00> : vector<4x8x8xf32>
    %45 = tpu.matmul %38, %41, %cst_18 {dimension_numbers = #tpu.dot_dimension_numbers<[2], [2], [1], [1], [0, 0, 0, 1, 1, 1], [0], [0]>} : vector<4x8x8xf32>, vector<4x8x8xf32>, vector<4x8x8xf32> -> vector<4x8x8xf32>
    "tpu.trace_stop"() : () -> ()
    %46 = tpu.iota {dimensions = array<i32: 0>} : vector<8x8xi32>
    %47 = tpu.iota {dimensions = array<i32: 1>} : vector<8x8xi32>
    %48 = arith.cmpi sle, %47, %46 : vector<8x8xi32>
    %49 = vector.shape_cast %48 : vector<8x8xi1> to vector<1x8x8xi1>
    %cst_19 = arith.constant -1.000000e+30 : f32
    %50 = vector.shape_cast %49 : vector<1x8x8xi1> to vector<1x8x8xi1>
    %51 = vector.broadcast %50 : vector<1x8x8xi1> to vector<4x8x8xi1>
    %52 = vector.broadcast %cst_19 : f32 to vector<4x8x8xf32>
    %53 = arith.select %51, %45, %52 : vector<4x8x8xi1>, vector<4x8x8xf32>
    %cst_20 = arith.constant dense<0xFF800000> : vector<4x8xf32>
    %54 = vector.multi_reduction <maximumf>, %53, %cst_20 [2] : vector<4x8x8xf32> to vector<4x8xf32>
    %55 = vector.shape_cast %54 : vector<4x8xf32> to vector<4x8x1xf32>
    %56 = vector.broadcast %55 : vector<4x8x1xf32> to vector<4x8x8xf32>
    %57 = arith.subf %53, %56 : vector<4x8x8xf32>
    %58 = math.exp %57 : vector<4x8x8xf32>
    %cst_21 = arith.constant dense<0.000000e+00> : vector<4x8xf32>
    %59 = vector.multi_reduction <add>, %58, %cst_21 [2] : vector<4x8x8xf32> to vector<4x8xf32>
    %60 = vector.shape_cast %59 : vector<4x8xf32> to vector<4x8x1xf32>
    %61 = tpu.reciprocal %60 {approx = true} : vector<4x8x1xf32> -> vector<4x8x1xf32>
    %62 = vector.broadcast %61 : vector<4x8x1xf32> to vector<4x8x8xf32>
    %63 = arith.mulf %58, %62 : vector<4x8x8xf32>
    "tpu.trace_start"() <{level = 10 : i32, message = "gts,gsd->gtd"}> : () -> ()
    %cst_22 = arith.constant dense<0.000000e+00> : vector<4x8x8xf32>
    %64 = tpu.matmul %63, %44, %cst_22 {dimension_numbers = #tpu.dot_dimension_numbers<[2], [1], [1], [2], [0, 0, 0, 1, 1, 2], [0], [0]>} : vector<4x8x8xf32>, vector<4x8x8xf32>, vector<4x8x8xf32> -> vector<4x8x8xf32>
    "tpu.trace_stop"() : () -> ()
    %65 = vector.shape_cast %64 : vector<4x8x8xf32> to vector<4x1x8x8xf32>
    %66 = vector.shape_cast %65 : vector<4x1x8x8xf32> to vector<4x8x8xf32>
    %c0_23 = arith.constant 0 : index
    %c0_24 = arith.constant 0 : index
    %c0_25 = arith.constant 0 : index
    %67 = vector.load %arg4[%c0_23, %c0_24, %c0_25] : memref<4x8x32xf32, #tpu.memory_space<vmem>>, vector<4x8x32xf32>
    "tpu.trace_start"() <{level = 10 : i32, message = "hmd,hde->hme"}> : () -> ()
    %cst_26 = arith.constant dense<0.000000e+00> : vector<4x8x32xf32>
    %68 = tpu.matmul %66, %67, %cst_26 {dimension_numbers = #tpu.dot_dimension_numbers<[2], [1], [1], [2], [0, 0, 0, 1, 1, 2], [0], [0]>} : vector<4x8x8xf32>, vector<4x8x32xf32>, vector<4x8x32xf32> -> vector<4x8x32xf32>
    "tpu.trace_stop"() : () -> ()
    %cst_27 = arith.constant dense<0.000000e+00> : vector<8x32xf32>
    %69 = vector.multi_reduction <add>, %68, %cst_27 [0] : vector<4x8x32xf32> to vector<8x32xf32>
    %c0_28 = arith.constant 0 : index
    %c0_29 = arith.constant 0 : index
    %70 = vector.load %arg5[%c0_28, %c0_29] : memref<1x32xf32, #tpu.memory_space<vmem>>, vector<1x32xf32>
    %71 = vector.broadcast %70 : vector<1x32xf32> to vector<8x32xf32>
    %72 = arith.addf %69, %71 : vector<8x32xf32>
    %73 = arith.addf %25, %72 : vector<8x32xf32>
    %c0_30 = arith.constant 0 : index
    %c0_31 = arith.constant 0 : index
    %74 = vector.load %arg8[%c0_30, %c0_31] : memref<1x32xf32, #tpu.memory_space<vmem>>, vector<1x32xf32>
    %c0_32 = arith.constant 0 : index
    %c0_33 = arith.constant 0 : index
    %75 = vector.load %arg9[%c0_32, %c0_33] : memref<1x32xf32, #tpu.memory_space<vmem>>, vector<1x32xf32>
    %cst_34 = arith.constant dense<0.000000e+00> : vector<8xf32>
    %76 = vector.multi_reduction <add>, %73, %cst_34 [1] : vector<8x32xf32> to vector<8xf32>
    %77 = vector.shape_cast %76 : vector<8xf32> to vector<8x1xf32>
    %cst_35 = arith.constant 3.200000e+01 : f32
    %78 = vector.broadcast %cst_35 : f32 to vector<8x1xf32>
    %79 = arith.divf %77, %78 : vector<8x1xf32>
    %80 = vector.broadcast %79 : vector<8x1xf32> to vector<8x32xf32>
    %81 = arith.subf %73, %80 : vector<8x32xf32>
    %82 = arith.mulf %81, %81 : vector<8x32xf32>
    %cst_36 = arith.constant dense<0.000000e+00> : vector<8xf32>
    %83 = vector.multi_reduction <add>, %82, %cst_36 [1] : vector<8x32xf32> to vector<8xf32>
    %84 = vector.shape_cast %83 : vector<8xf32> to vector<8x1xf32>
    %cst_37 = arith.constant 3.200000e+01 : f32
    %85 = vector.broadcast %cst_37 : f32 to vector<8x1xf32>
    %86 = arith.divf %84, %85 : vector<8x1xf32>
    %87 = vector.broadcast %79 : vector<8x1xf32> to vector<8x32xf32>
    %88 = arith.subf %73, %87 : vector<8x32xf32>
    %cst_38 = arith.constant 9.99999974E-6 : f32
    %89 = vector.broadcast %cst_38 : f32 to vector<8x1xf32>
    %90 = arith.addf %86, %89 : vector<8x1xf32>
    %91 = math.rsqrt %90 : vector<8x1xf32>
    %92 = vector.broadcast %91 : vector<8x1xf32> to vector<8x32xf32>
    %93 = arith.mulf %88, %92 : vector<8x32xf32>
    %94 = vector.broadcast %74 : vector<1x32xf32> to vector<8x32xf32>
    %95 = arith.mulf %93, %94 : vector<8x32xf32>
    %96 = vector.broadcast %75 : vector<1x32xf32> to vector<8x32xf32>
    %97 = arith.addf %95, %96 : vector<8x32xf32>
    %c0_39 = arith.constant 0 : index
    %c0_40 = arith.constant 0 : index
    %98 = vector.load %arg10[%c0_39, %c0_40] : memref<32x128xf32, #tpu.memory_space<vmem>>, vector<32x128xf32>
    %cst_41 = arith.constant dense<0.000000e+00> : vector<8x128xf32>
    %99 = tpu.matmul %97, %98, %cst_41 {dimension_numbers = #tpu.dot_dimension_numbers<[1], [0], [0], [1], [0, 0, 1, 1], [], []>} : vector<8x32xf32>, vector<32x128xf32>, vector<8x128xf32> -> vector<8x128xf32>
    %c0_42 = arith.constant 0 : index
    %c0_43 = arith.constant 0 : index
    %100 = vector.load %arg11[%c0_42, %c0_43] : memref<1x128xf32, #tpu.memory_space<vmem>>, vector<1x128xf32>
    %101 = vector.broadcast %100 : vector<1x128xf32> to vector<8x128xf32>
    %102 = arith.addf %99, %101 : vector<8x128xf32>
    %cst_44 = arith.constant 0.000000e+00 : f32
    %103 = vector.broadcast %cst_44 : f32 to vector<8x128xf32>
    %104 = arith.maximumf %102, %103 : vector<8x128xf32>
    %c0_45 = arith.constant 0 : index
    %c0_46 = arith.constant 0 : index
    %105 = vector.load %arg12[%c0_45, %c0_46] : memref<128x32xf32, #tpu.memory_space<vmem>>, vector<128x32xf32>
    %cst_47 = arith.constant dense<0.000000e+00> : vector<8x32xf32>
    %106 = tpu.matmul %104, %105, %cst_47 {dimension_numbers = #tpu.dot_dimension_numbers<[1], [0], [0], [1], [0, 0, 1, 1], [], []>} : vector<8x128xf32>, vector<128x32xf32>, vector<8x32xf32> -> vector<8x32xf32>
    %c0_48 = arith.constant 0 : index
    %c0_49 = arith.constant 0 : index
    %107 = vector.load %arg13[%c0_48, %c0_49] : memref<1x32xf32, #tpu.memory_space<vmem>>, vector<1x32xf32>
    %108 = vector.broadcast %107 : vector<1x32xf32> to vector<8x32xf32>
    %109 = arith.addf %106, %108 : vector<8x32xf32>
    %110 = arith.addf %97, %109 : vector<8x32xf32>
    %111 = vector.shape_cast %110 : vector<8x32xf32> to vector<1x8x32xf32>
    %c0_50 = arith.constant 0 : index
    %c0_51 = arith.constant 0 : index
    %c0_52 = arith.constant 0 : index
    %112 = vector.load %arg14[%c0_50, %c0_51, %c0_52] : memref<1x8x32xf32, #tpu.memory_space<vmem>>, vector<1x8x32xf32>
    tpu.vector_store %arg14[%c0_50, %c0_51, %c0_52], %111 {strides = array<i32>} : memref<1x8x32xf32, #tpu.memory_space<vmem>>, vector<1x8x32xf32>,
    return
  }
  func.func @transform_0(%arg0: i32) -> (i32, i32, i32) {
    %c0_i32 = arith.constant 0 : i32
    %c0_i32_0 = arith.constant 0 : i32
    %c0_i32_1 = arith.constant 0 : i32
    return %arg0, %c0_i32, %c0_i32_0 : i32, i32, i32
  }
  func.func @transform_1(%arg0: i32) -> (i32, i32, i32) {
    %c0_i32 = arith.constant 0 : i32
    %c0_i32_0 = arith.constant 0 : i32
    %c0_i32_1 = arith.constant 0 : i32
    %c0_i32_2 = arith.constant 0 : i32
    return %c0_i32, %c0_i32_0, %c0_i32_1 : i32, i32, i32
  }
  func.func @transform_2(%arg0: i32) -> (i32, i32, i32) {
    %c0_i32 = arith.constant 0 : i32
    %c0_i32_0 = arith.constant 0 : i32
    %c0_i32_1 = arith.constant 0 : i32
    %c0_i32_2 = arith.constant 0 : i32
    return %c0_i32, %c0_i32_0, %c0_i32_1 : i32, i32, i32
  }
  func.func @transform_3(%arg0: i32) -> (i32, i32, i32) {
    %c0_i32 = arith.constant 0 : i32
    %c0_i32_0 = arith.constant 0 : i32
    %c0_i32_1 = arith.constant 0 : i32
    %c0_i32_2 = arith.constant 0 : i32
    return %c0_i32, %c0_i32_0, %c0_i32_1 : i32, i32, i32
  }
  func.func @transform_4(%arg0: i32) -> (i32, i32) {
    %c0_i32 = arith.constant 0 : i32
    %c0_i32_0 = arith.constant 0 : i32
    %c0_i32_1 = arith.constant 0 : i32
    return %c0_i32, %c0_i32_0 : i32, i32
  }
  func.func @transform_5(%arg0: i32) -> (i32, i32) {
    %c0_i32 = arith.constant 0 : i32
    %c0_i32_0 = arith.constant 0 : i32
    %c0_i32_1 = arith.constant 0 : i32
    return %c0_i32, %c0_i32_0 : i32, i32
  }
  func.func @transform_6(%arg0: i32) -> (i32, i32) {
    %c0_i32 = arith.constant 0 : i32
    %c0_i32_0 = arith.constant 0 : i32
    %c0_i32_1 = arith.constant 0 : i32
    return %c0_i32, %c0_i32_0 : i32, i32
  }
  func.func @transform_7(%arg0: i32) -> (i32, i32) {
    %c0_i32 = arith.constant 0 : i32
    %c0_i32_0 = arith.constant 0 : i32
    %c0_i32_1 = arith.constant 0 : i32
    return %c0_i32, %c0_i32_0 : i32, i32
  }
  func.func @transform_8(%arg0: i32) -> (i32, i32) {
    %c0_i32 = arith.constant 0 : i32
    %c0_i32_0 = arith.constant 0 : i32
    %c0_i32_1 = arith.constant 0 : i32
    return %c0_i32, %c0_i32_0 : i32, i32
  }
  func.func @transform_9(%arg0: i32) -> (i32, i32) {
    %c0_i32 = arith.constant 0 : i32
    %c0_i32_0 = arith.constant 0 : i32
    %c0_i32_1 = arith.constant 0 : i32
    return %c0_i32, %c0_i32_0 : i32, i32
  }
  func.func @transform_10(%arg0: i32) -> (i32, i32) {
    %c0_i32 = arith.constant 0 : i32
    %c0_i32_0 = arith.constant 0 : i32
    %c0_i32_1 = arith.constant 0 : i32
    return %c0_i32, %c0_i32_0 : i32, i32
  }
  func.func @transform_11(%arg0: i32) -> (i32, i32) {
    %c0_i32 = arith.constant 0 : i32
    %c0_i32_0 = arith.constant 0 : i32
    %c0_i32_1 = arith.constant 0 : i32
    return %c0_i32, %c0_i32_0 : i32, i32
  }
  func.func @transform_12(%arg0: i32) -> (i32, i32) {
    %c0_i32 = arith.constant 0 : i32
    %c0_i32_0 = arith.constant 0 : i32
    %c0_i32_1 = arith.constant 0 : i32
    return %c0_i32, %c0_i32_0 : i32, i32
  }
  func.func @transform_13(%arg0: i32) -> (i32, i32, i32) {
    %c0_i32 = arith.constant 0 : i32
    %c0_i32_0 = arith.constant 0 : i32
    %c0_i32_1 = arith.constant 0 : i32
    return %arg0, %c0_i32, %c0_i32_0 : i32, i32, i32
  }
}

</mosaic_0001>

<llo_original>
// kernel: tpu_custom_call.1
$region0: #{tpu_custom_call.1}
  #allocation0 [shape = 'u32[]', space=smem, size = 0x4, offset = 0x4, fixed_abs, tag = 'smem constant byte address 0x4 - core index']
  #allocation1 [shape = 'u32[144,128]{1,0:T(1,128)}', space=vmem, size = 0x12000, scoped, tag = 'internal scratch']
  %s0 = inlined_call_operand.vmem [shape: f32[2,8,32], index: 0, kind: input, shape index: {}]
  %s1 = inlined_call_operand.vmem [shape: f32[12,32,8], index: 1, kind: input, shape index: {}]
  %s2 = inlined_call_operand.vmem [shape: f32[12,1,8], index: 2, kind: input, shape index: {}]
  %s3 = inlined_call_operand.vmem [shape: f32[4,8,32], index: 3, kind: input, shape index: {}]
  %s4 = inlined_call_operand.vmem [shape: f32[1,32], index: 4, kind: input, shape index: {}]
  %s5 = inlined_call_operand.vmem [shape: f32[1,32], index: 5, kind: input, shape index: {}]
  %s6 = inlined_call_operand.vmem [shape: f32[1,32], index: 6, kind: input, shape index: {}]
  %s7 = inlined_call_operand.vmem [shape: f32[1,32], index: 7, kind: input, shape index: {}]
  %s8 = inlined_call_operand.vmem [shape: f32[1,32], index: 8, kind: input, shape index: {}]
  %s9 = inlined_call_operand.vmem [shape: f32[32,128], index: 9, kind: input, shape index: {}]
  %s10 = inlined_call_operand.vmem [shape: f32[1,128], index: 10, kind: input, shape index: {}]
  %s11 = inlined_call_operand.vmem [shape: f32[128,32], index: 11, kind: input, shape index: {}]
  %s12 = inlined_call_operand.vmem [shape: f32[1,32], index: 12, kind: input, shape index: {}]
  %s13 = inlined_call_operand.hbm [shape: f32[2,8,32], index: 13, kind: output, shape index: {}]
  %s14 = sld [smem:[#allocation0]]
  $region85: #{tpu_custom_call.1} parent=0
    _
  %s16 = ssub.s32 1, %s14
  %s17 = scalar_select 0, %s16, %s14
  $region1: #{tpu_custom_call.1} parent=0
    #allocation2 [shape = 'u8[8192]{0}', space=vmem, size = 0x2000, scoped, tag = 'output window, operand 0']
    #allocation3 [shape = 's32[2]{0}', space=sflag, size = 0x8, scoped, tag = 'scoped memory for tpu_custom_call.1']
    %18 = vsyncpa [#allocation3], 0
    %s19 = scalar_lea.sflag [#allocation3], 1
    %20 = vsyncpa %s19, 0
    loop: start=0, step=1, limit=4
    $region2: #{tpu_custom_call.1} parent=1 // loop_pre_header
      _
    $region3: #{tpu_custom_call.1} parent=1 // loop_header
      %s22 = sphi 0, %s26
      %p23 = scmp.ge.s32.totalorder %s22, 4
      %s32 = sphi 0, %s34
      %s35 = sphi 0, %s32
      %s36 = sphi 0, %s35
      %s52 = sphi 0, %s36
      %s56 = sphi 0, %s56
      %s58 = sphi 0, %s56
      %s59 = sphi 0, %s58
      %s73 = sphi 0, %s59
      %s77 = sphi 0, %s77
      %s79 = sphi 0, %s77
      %s80 = sphi 0, %s79
      %s94 = sphi 0, %s80
      %s98 = sphi 0, %s98
      %s100 = sphi 0, %s98
      %s101 = sphi 0, %s100
      %s115 = sphi 0, %s101
      %s119 = sphi 0, %s119
      %s121 = sphi 0, %s119
      %s122 = sphi 0, %s121
      %s136 = sphi 0, %s122
      %s140 = sphi 0, %s140
      %s142 = sphi 0, %s140
      %s143 = sphi 0, %s142
      %s157 = sphi 0, %s143
      %s161 = sphi 0, %s161
      %s163 = sphi 0, %s161
      %s164 = sphi 0, %s163
      %s178 = sphi 0, %s164
      %s182 = sphi 0, %s182
      %s184 = sphi 0, %s182
      %s185 = sphi 0, %s184
      %s199 = sphi 0, %s185
      %s203 = sphi 0, %s203
      %s205 = sphi 0, %s203
      %s206 = sphi 0, %s205
      %s220 = sphi 0, %s206
      %s224 = sphi 0, %s224
      %s226 = sphi 0, %s224
      %s227 = sphi 0, %s226
      %s241 = sphi 0, %s227
      %s245 = sphi 0, %s245
      %s247 = sphi 0, %s245
      %s248 = sphi 0, %s247
      %s262 = sphi 0, %s248
      %s266 = sphi 0, %s266
      %s268 = sphi 0, %s266
      %s269 = sphi 0, %s268
      %s283 = sphi 0, %s269
      %s287 = sphi 0, %s287
      %s289 = sphi 0, %s287
      %s290 = sphi 0, %s289
      %s304 = sphi 0, %s290
      %s310 = sphi 0, %s312
      %s313 = sphi 0, %s310
      %s314 = sphi 0, %s313
      %s330 = sphi 0, %s314
    $region4: #{tpu_custom_call.1} parent=1 // loop_header_branch
      %25 = sbr.rel (%p23) target = $region8
    $region5: #{tpu_custom_call.1} parent=1 // loop_body
      %s27 = ssub.s32 %s22, 1
      %s28 = ssub.s32 %s22, 2
      %s29 = sadd.s32 %s22, 1
      %s30 = ssub.s32 %s22, %s29
      %p31 = scmp.eq.s32.totalorder %s30, 0
      %s33 = sadd.s32 %s32, 1
      %s34 = scalar_select %p31, %s32, %s33
      %p37 = pneg %p31
      %p38 = scmp.eq.s32.totalorder %s22, 1
      %p39 = por %p37, %p38
      %p40 = scmp.ne.s32.totalorder %s32, %s35
      %p41 = scmp.eq.s32.totalorder %s22, 0
      %p42 = por %p40, %p41
      %p43 = scmp.ne.s32.totalorder %s32, %s35
      %p44 = scmp.eq.s32.totalorder %s27, 1
      %p45 = por %p43, %p44
      %p46 = scmp.ne.s32.totalorder %s35, %s36
      %p47 = scmp.eq.s32.totalorder %s27, 0
      %p48 = por %p46, %p47
      %p49 = scmp.ne.s32.totalorder %s35, %s36
      %p50 = scmp.eq.s32.totalorder %s28, 1
      %p51 = por %p49, %p50
      %p53 = scmp.ne.s32.totalorder %s36, %s52
      %p54 = scmp.eq.s32.totalorder %s28, 0
      %p55 = por %p53, %p54
      %s57 = sadd.s32 %s56, 1
      %p60 = scmp.eq.s32.totalorder %s22, 1
      %p61 = scmp.ne.s32.totalorder %s56, %s58
      %p62 = scmp.eq.s32.totalorder %s22, 0
      %p63 = por %p61, %p62
      %p64 = scmp.ne.s32.totalorder %s56, %s58
      %p65 = scmp.eq.s32.totalorder %s27, 1
      %p66 = por %p64, %p65
      %p67 = scmp.ne.s32.totalorder %s58, %s59
      %p68 = scmp.eq.s32.totalorder %s27, 0
      %p69 = por %p67, %p68
      %p70 = scmp.ne.s32.totalorder %s58, %s59
      %p71 = scmp.eq.s32.totalorder %s28, 1
      %p72 = por %p70, %p71
      %p74 = scmp.ne.s32.totalorder %s59, %s73
      %p75 = scmp.eq.s32.totalorder %s28, 0
      %p76 = por %p74, %p75
      %s78 = sadd.s32 %s77, 1
      %p81 = scmp.eq.s32.totalorder %s22, 1
      %p82 = scmp.ne.s32.totalorder %s77, %s79
      %p83 = scmp.eq.s32.totalorder %s22, 0
      %p84 = por %p82, %p83
      %p85 = scmp.ne.s32.totalorder %s77, %s79
      %p86 = scmp.eq.s32.totalorder %s27, 1
      %p87 = por %p85, %p86
      %p88 = scmp.ne.s32.totalorder %s79, %s80
      %p89 = scmp.eq.s32.totalorder %s27, 0
      %p90 = por %p88, %p89
      %p91 = scmp.ne.s32.totalorder %s79, %s80
      %p92 = scmp.eq.s32.totalorder %s28, 1
      %p93 = por %p91, %p92
      %p95 = scmp.ne.s32.totalorder %s80, %s94
      %p96 = scmp.eq.s32.totalorder %s28, 0
      %p97 = por %p95, %p96
      %s99 = sadd.s32 %s98, 1
      %p102 = scmp.eq.s32.totalorder %s22, 1
      %p103 = scmp.ne.s32.totalorder %s98, %s100
      %p104 = scmp.eq.s32.totalorder %s22, 0
      %p105 = por %p103, %p104
      %p106 = scmp.ne.s32.totalorder %s98, %s100
      %p107 = scmp.eq.s32.totalorder %s27, 1
      %p108 = por %p106, %p107
      %p109 = scmp.ne.s32.totalorder %s100, %s101
      %p110 = scmp.eq.s32.totalorder %s27, 0
      %p111 = por %p109, %p110
      %p112 = scmp.ne.s32.totalorder %s100, %s101
      %p113 = scmp.eq.s32.totalorder %s28, 1
      %p114 = por %p112, %p113
      %p116 = scmp.ne.s32.totalorder %s101, %s115
      %p117 = scmp.eq.s32.totalorder %s28, 0
      %p118 = por %p116, %p117
      %s120 = sadd.s32 %s119, 1
      %p123 = scmp.eq.s32.totalorder %s22, 1
      %p124 = scmp.ne.s32.totalorder %s119, %s121
      %p125 = scmp.eq.s32.totalorder %s22, 0
      %p126 = por %p124, %p125
      %p127 = scmp.ne.s32.totalorder %s119, %s121
      %p128 = scmp.eq.s32.totalorder %s27, 1
      %p129 = por %p127, %p128
      %p130 = scmp.ne.s32.totalorder %s121, %s122
      %p131 = scmp.eq.s32.totalorder %s27, 0
      %p132 = por %p130, %p131
      %p133 = scmp.ne.s32.totalorder %s121, %s122
      %p134 = scmp.eq.s32.totalorder %s28, 1
      %p135 = por %p133, %p134
      %p137 = scmp.ne.s32.totalorder %s122, %s136
      %p138 = scmp.eq.s32.totalorder %s28, 0
      %p139 = por %p137, %p138
      %s141 = sadd.s32 %s140, 1
      %p144 = scmp.eq.s32.totalorder %s22, 1
      %p145 = scmp.ne.s32.totalorder %s140, %s142
      %p146 = scmp.eq.s32.totalorder %s22, 0
      %p147 = por %p145, %p146
      %p148 = scmp.ne.s32.totalorder %s140, %s142
      %p149 = scmp.eq.s32.totalorder %s27, 1
      %p150 = por %p148, %p149
      %p151 = scmp.ne.s32.totalorder %s142, %s143
      %p152 = scmp.eq.s32.totalorder %s27, 0
      %p153 = por %p151, %p152
      %p154 = scmp.ne.s32.totalorder %s142, %s143
      %p155 = scmp.eq.s32.totalorder %s28, 1
      %p156 = por %p154, %p155
      %p158 = scmp.ne.s32.totalorder %s143, %s157
      %p159 = scmp.eq.s32.totalorder %s28, 0
      %p160 = por %p158, %p159
      %s162 = sadd.s32 %s161, 1
      %p165 = scmp.eq.s32.totalorder %s22, 1
      %p166 = scmp.ne.s32.totalorder %s161, %s163
      %p167 = scmp.eq.s32.totalorder %s22, 0
      %p168 = por %p166, %p167
      %p169 = scmp.ne.s32.totalorder %s161, %s163
      %p170 = scmp.eq.s32.totalorder %s27, 1
      %p171 = por %p169, %p170
      %p172 = scmp.ne.s32.totalorder %s163, %s164
      %p173 = scmp.eq.s32.totalorder %s27, 0
      %p174 = por %p172, %p173
      %p175 = scmp.ne.s32.totalorder %s163, %s164
      %p176 = scmp.eq.s32.totalorder %s28, 1
      %p177 = por %p175, %p176
      %p179 = scmp.ne.s32.totalorder %s164, %s178
      %p180 = scmp.eq.s32.totalorder %s28, 0
      %p181 = por %p179, %p180
      %s183 = sadd.s32 %s182, 1
      %p186 = scmp.eq.s32.totalorder %s22, 1
      %p187 = scmp.ne.s32.totalorder %s182, %s184
      %p188 = scmp.eq.s32.totalorder %s22, 0
      %p189 = por %p187, %p188
      %p190 = scmp.ne.s32.totalorder %s182, %s184
      %p191 = scmp.eq.s32.totalorder %s27, 1
      %p192 = por %p190, %p191
      %p193 = scmp.ne.s32.totalorder %s184, %s185
      %p194 = scmp.eq.s32.totalorder %s27, 0
      %p195 = por %p193, %p194
      %p196 = scmp.ne.s32.totalorder %s184, %s185
      %p197 = scmp.eq.s32.totalorder %s28, 1
      %p198 = por %p196, %p197
      %p200 = scmp.ne.s32.totalorder %s185, %s199
      %p201 = scmp.eq.s32.totalorder %s28, 0
      %p202 = por %p200, %p201
      %s204 = sadd.s32 %s203, 1
      %p207 = scmp.eq.s32.totalorder %s22, 1
      %p208 = scmp.ne.s32.totalorder %s203, %s205
      %p209 = scmp.eq.s32.totalorder %s22, 0
      %p210 = por %p208, %p209
      %p211 = scmp.ne.s32.totalorder %s203, %s205
      %p212 = scmp.eq.s32.totalorder %s27, 1
      %p213 = por %p211, %p212
      %p214 = scmp.ne.s32.totalorder %s205, %s206
      %p215 = scmp.eq.s32.totalorder %s27, 0
      %p216 = por %p214, %p215
      %p217 = scmp.ne.s32.totalorder %s205, %s206
      %p218 = scmp.eq.s32.totalorder %s28, 1
      %p219 = por %p217, %p218
      %p221 = scmp.ne.s32.totalorder %s206, %s220
      %p222 = scmp.eq.s32.totalorder %s28, 0
      %p223 = por %p221, %p222
      %s225 = sadd.s32 %s224, 1
      %p228 = scmp.eq.s32.totalorder %s22, 1
      %p229 = scmp.ne.s32.totalorder %s224, %s226
      %p230 = scmp.eq.s32.totalorder %s22, 0
      %p231 = por %p229, %p230
      %p232 = scmp.ne.s32.totalorder %s224, %s226
      %p233 = scmp.eq.s32.totalorder %s27, 1
      %p234 = por %p232, %p233
      %p235 = scmp.ne.s32.totalorder %s226, %s227
      %p236 = scmp.eq.s32.totalorder %s27, 0
      %p237 = por %p235, %p236
      %p238 = scmp.ne.s32.totalorder %s226, %s227
      %p239 = scmp.eq.s32.totalorder %s28, 1
      %p240 = por %p238, %p239
      %p242 = scmp.ne.s32.totalorder %s227, %s241
      %p243 = scmp.eq.s32.totalorder %s28, 0
      %p244 = por %p242, %p243
      %s246 = sadd.s32 %s245, 1
      %p249 = scmp.eq.s32.totalorder %s22, 1
      %p250 = scmp.ne.s32.totalorder %s245, %s247
      %p251 = scmp.eq.s32.totalorder %s22, 0
      %p252 = por %p250, %p251
      %p253 = scmp.ne.s32.totalorder %s245, %s247
      %p254 = scmp.eq.s32.totalorder %s27, 1
      %p255 = por %p253, %p254
      %p256 = scmp.ne.s32.totalorder %s247, %s248
      %p257 = scmp.eq.s32.totalorder %s27, 0
      %p258 = por %p256, %p257
      %p259 = scmp.ne.s32.totalorder %s247, %s248
      %p260 = scmp.eq.s32.totalorder %s28, 1
      %p261 = por %p259, %p260
      %p263 = scmp.ne.s32.totalorder %s248, %s262
      %p264 = scmp.eq.s32.totalorder %s28, 0
      %p265 = por %p263, %p264
      %s267 = sadd.s32 %s266, 1
      %p270 = scmp.eq.s32.totalorder %s22, 1
      %p271 = scmp.ne.s32.totalorder %s266, %s268
      %p272 = scmp.eq.s32.totalorder %s22, 0
      %p273 = por %p271, %p272
      %p274 = scmp.ne.s32.totalorder %s266, %s268
      %p275 = scmp.eq.s32.totalorder %s27, 1
      %p276 = por %p274, %p275
      %p277 = scmp.ne.s32.totalorder %s268, %s269
      %p278 = scmp.eq.s32.totalorder %s27, 0
      %p279 = por %p277, %p278
      %p280 = scmp.ne.s32.totalorder %s268, %s269
      %p281 = scmp.eq.s32.totalorder %s28, 1
      %p282 = por %p280, %p281
      %p284 = scmp.ne.s32.totalorder %s269, %s283
      %p285 = scmp.eq.s32.totalorder %s28, 0
      %p286 = por %p284, %p285
      %s288 = sadd.s32 %s287, 1
      %p291 = scmp.eq.s32.totalorder %s22, 1
      %p292 = scmp.ne.s32.totalorder %s287, %s289
      %p293 = scmp.eq.s32.totalorder %s22, 0
      %p294 = por %p292, %p293
      %p295 = scmp.ne.s32.totalorder %s287, %s289
      %p296 = scmp.eq.s32.totalorder %s27, 1
      %p297 = por %p295, %p296
      %p298 = scmp.ne.s32.totalorder %s289, %s290
      %p299 = scmp.eq.s32.totalorder %s27, 0
      %p300 = por %p298, %p299
      %p301 = scmp.ne.s32.totalorder %s289, %s290
      %p302 = scmp.eq.s32.totalorder %s28, 1
      %p303 = por %p301, %p302
      %p305 = scmp.ne.s32.totalorder %s290, %s304
      %p306 = scmp.eq.s32.totalorder %s28, 0
      %p307 = por %p305, %p306
      %s308 = ssub.s32 %s22, %s29
      %p309 = scmp.eq.s32.totalorder %s308, 0
      %s311 = sadd.s32 %s310, 1
      %s312 = scalar_select %p309, %s310, %s311
      %p315 = pneg %p309
      %p316 = scmp.eq.s32.totalorder %s22, 1
      %p317 = por %p315, %p316
      %p318 = scmp.ne.s32.totalorder %s310, %s313
      %p319 = scmp.eq.s32.totalorder %s22, 0
      %p320 = por %p318, %p319
      %p321 = scmp.ne.s32.totalorder %s310, %s313
      %p322 = scmp.eq.s32.totalorder %s27, 1
      %p323 = por %p321, %p322
      %p324 = scmp.ne.s32.totalorder %s313, %s314
      %p325 = scmp.eq.s32.totalorder %s27, 0
      %p326 = por %p324, %p325
      %p327 = scmp.ne.s32.totalorder %s313, %s314
      %p328 = scmp.eq.s32.totalorder %s28, 1
      %p329 = por %p327, %p328
      %p331 = scmp.ne.s32.totalorder %s314, %s330
      %p332 = scmp.eq.s32.totalorder %s28, 0
      %p333 = por %p331, %p332
      %p334 = scmp.le.s32.totalorder 1, %s22
      %p335 = scmp.lt.s32.totalorder %s22, 3
      %p336 = pnand %p334, %p335
      %p337 = pneg %p336
      // Predicated region
      $region9: #{tpu_custom_call.1} parent=5 // pred_check
        _
      $region10: #{tpu_custom_call.1} parent=5 // pred_check_branch
        %339 = sbr.rel (%p336) target = $region12
      $region11: #{tpu_custom_call.1} parent=5 // pred_region
        %s340 = ssub.s32 %s22, 1
        // Predicated region
        $region13: #{tpu_custom_call.1} parent=11 // pred_check
          %p341 = pneg %p69
        $region14: #{tpu_custom_call.1} parent=11 // pred_check_branch
          %343 = sbr.rel (%p341) target = $region16
        $region15: #{tpu_custom_call.1} parent=11 // pred_region
          _
        $region16: #{tpu_custom_call.1} parent=11 // pred_fallthru
          _
        // Predicated region
        $region17: #{tpu_custom_call.1} parent=11 // pred_check
          %p344 = pneg %p90
        $region18: #{tpu_custom_call.1} parent=11 // pred_check_branch
          %346 = sbr.rel (%p344) target = $region20
        $region19: #{tpu_custom_call.1} parent=11 // pred_region
          _
        $region20: #{tpu_custom_call.1} parent=11 // pred_fallthru
          _
        // Predicated region
        $region21: #{tpu_custom_call.1} parent=11 // pred_check
          %p347 = pneg %p111
        $region22: #{tpu_custom_call.1} parent=11 // pred_check_branch
          %349 = sbr.rel (%p347) target = $region24
        $region23: #{tpu_custom_call.1} parent=11 // pred_region
          _
        $region24: #{tpu_custom_call.1} parent=11 // pred_fallthru
          _
        // Predicated region
        $region25: #{tpu_custom_call.1} parent=11 // pred_check
          %p350 = pneg %p132
        $region26: #{tpu_custom_call.1} parent=11 // pred_check_branch
          %352 = sbr.rel (%p350) target = $region28
        $region27: #{tpu_custom_call.1} parent=11 // pred_region
          _
        $region28: #{tpu_custom_call.1} parent=11 // pred_fallthru
          _
        // Predicated region
        $region29: #{tpu_custom_call.1} parent=11 // pred_check
          %p353 = pneg %p153
        $region30: #{tpu_custom_call.1} parent=11 // pred_check_branch
          %355 = sbr.rel (%p353) target = $region32
        $region31: #{tpu_custom_call.1} parent=11 // pred_region
          _
        $region32: #{tpu_custom_call.1} parent=11 // pred_fallthru
          _
        // Predicated region
        $region33: #{tpu_custom_call.1} parent=11 // pred_check
          %p356 = pneg %p174
        $region34: #{tpu_custom_call.1} parent=11 // pred_check_branch
          %358 = sbr.rel (%p356) target = $region36
        $region35: #{tpu_custom_call.1} parent=11 // pred_region
          _
        $region36: #{tpu_custom_call.1} parent=11 // pred_fallthru
          _
        // Predicated region
        $region37: #{tpu_custom_call.1} parent=11 // pred_check
          %p359 = pneg %p195
        $region38: #{tpu_custom_call.1} parent=11 // pred_check_branch
          %361 = sbr.rel (%p359) target = $region40
        $region39: #{tpu_custom_call.1} parent=11 // pred_region
          _
        $region40: #{tpu_custom_call.1} parent=11 // pred_fallthru
          _
        // Predicated region
        $region41: #{tpu_custom_call.1} parent=11 // pred_check
          %p362 = pneg %p216
        $region42: #{tpu_custom_call.1} parent=11 // pred_check_branch
          %364 = sbr.rel (%p362) target = $region44
        $region43: #{tpu_custom_call.1} parent=11 // pred_region
          _
        $region44: #{tpu_custom_call.1} parent=11 // pred_fallthru
          _
        // Predicated region
        $region45: #{tpu_custom_call.1} parent=11 // pred_check
          %p365 = pneg %p237
        $region46: #{tpu_custom_call.1} parent=11 // pred_check_branch
          %367 = sbr.rel (%p365) target = $region48
        $region47: #{tpu_custom_call.1} parent=11 // pred_region
          _
        $region48: #{tpu_custom_call.1} parent=11 // pred_fallthru
          _
        // Predicated region
        $region49: #{tpu_custom_call.1} parent=11 // pred_check
          %p368 = pneg %p258
        $region50: #{tpu_custom_call.1} parent=11 // pred_check_branch
          %370 = sbr.rel (%p368) target = $region52
        $region51: #{tpu_custom_call.1} parent=11 // pred_region
          _
        $region52: #{tpu_custom_call.1} parent=11 // pred_fallthru
          _
        // Predicated region
        $region53: #{tpu_custom_call.1} parent=11 // pred_check
          %p371 = pneg %p279
        $region54: #{tpu_custom_call.1} parent=11 // pred_check_branch
          %373 = sbr.rel (%p371) target = $region56
        $region55: #{tpu_custom_call.1} parent=11 // pred_region
          _
        $region56: #{tpu_custom_call.1} parent=11 // pred_fallthru
          _
        // Predicated region
        $region57: #{tpu_custom_call.1} parent=11 // pred_check
          %p374 = pneg %p300
        $region58: #{tpu_custom_call.1} parent=11 // pred_check_branch
          %376 = sbr.rel (%p374) target = $region60
        $region59: #{tpu_custom_call.1} parent=11 // pred_region
          _
        $region60: #{tpu_custom_call.1} parent=11 // pred_fallthru
          _
      $region12: #{tpu_custom_call.1} parent=5 // pred_fallthru
        _
      %p377 = scmp.lt.s32.totalorder %s22, 2
      // Predicated region
      $region61: #{tpu_custom_call.1} parent=5 // pred_check
        %p378 = pneg %p377
      $region62: #{tpu_custom_call.1} parent=5 // pred_check_branch
        %380 = sbr.rel (%p378) target = $region64
      $region63: #{tpu_custom_call.1} parent=5 // pred_region
        // Predicated region
        $region65: #{tpu_custom_call.1} parent=63 // pred_check
          %p381 = pneg %p42
        $region66: #{tpu_custom_call.1} parent=63 // pred_check_branch
          %383 = sbr.rel (%p381) target = $region68
        $region67: #{tpu_custom_call.1} parent=63 // pred_region
          %p384 = scmp.lt.s32.totalorder %s22, 1
          %s385 = scalar_select %p384, %s22, 1
          %s386 = smul.addr %s385, 8
          %s387 = scalar_lea.vmem %s0, %s386
        $region68: #{tpu_custom_call.1} parent=63 // pred_fallthru
          _
      $region64: #{tpu_custom_call.1} parent=5 // pred_fallthru
        _
      %p388 = scmp.le.s32.totalorder 1, %s22
      %p389 = scmp.lt.s32.totalorder %s22, 3
      %p390 = pnand %p388, %p389
      %p391 = pneg %p390
      // Predicated region
      $region69: #{tpu_custom_call.1} parent=5 // pred_check
        _
      $region70: #{tpu_custom_call.1} parent=5 // pred_check_branch
        %393 = sbr.rel (%p390) target = $region72
      $region71: #{tpu_custom_call.1} parent=5 // pred_region
        %s394 = ssub.s32 %s22, 1
        %p395 = scmp.lt.s32.totalorder %s27, 1
        %s396 = scalar_select %p395, %s27, 1
        %s397 = smul.addr %s396, 8
        %s398 = scalar_lea.vmem %s0, %s397
        %p399 = pneg %p48
        %p400 = pneg %p45
        %p401 = pneg %p69
        %p402 = pneg %p66
        %p403 = pneg %p90
        %p404 = pneg %p87
        %p405 = pneg %p111
        %p406 = pneg %p108
        %p407 = pneg %p132
        %p408 = pneg %p129
        %p409 = pneg %p153
        %p410 = pneg %p150
        %p411 = pneg %p174
        %p412 = pneg %p171
        %p413 = pneg %p195
        %p414 = pneg %p192
        %p415 = pneg %p216
        %p416 = pneg %p213
        %p417 = pneg %p237
        %p418 = pneg %p234
        %p419 = pneg %p258
        %p420 = pneg %p255
        %p421 = pneg %p279
        %p422 = pneg %p276
        %p423 = pneg %p300
        %p424 = pneg %p297
        %p425 = pneg %p326
        %p426 = pneg %p323
        %s427 = sand.u32 %s313, 1
        %s428 = scalar_lea.sflag [#allocation3], %s427
        %s429 = sand.u32 %s313, 1
        %s430 = smul.addr %s429, 8
        %s431 = scalar_lea.vmem [#allocation2], %s430
        %p432 = scmp.lt.s32.totalorder %s27, 1
        %s433 = scalar_select %p432, %s27, 1
        %s434 = smul.addr %s433, 8
        %s435 = scalar_lea.vmem %s0, %s434
        %v436 = vld [vmem:[%s435] sm:$0xff]
        %v437 = vld [vmem:[%s5] sm:$0x1]
        %v438 = vld [vmem:[%s6] sm:$0x1]
        %vm439 = vcmask 261120
        %v440 = vsel %vm439, %v436, 0.0
        %441 = vadd.xlane.f32.xlu0 %v440
        %v442 = vpop.xlane.xlu0 %441
        %v443 = vrcp.pop 32.0
        %v444 = vmul.f32 %v442, %v443
        %v445 = vsub.f32 %v436, %v444
        %v446 = vmul.f32 %v445, %v445
        %v447 = vsel %vm439, %v446, 0.0
        %448 = vadd.xlane.f32.xlu0 %v447
        %v449 = vpop.xlane.xlu0 %448
        %v450 = vmul.f32 %v449, %v443
        %v451 = vadd.f32 %v450, 1e-05
        %v452 = vrsqrt.pop %v451
        %v453 = vmul.f32 %v445, %v452
        %v455 = vlaneseq
        %v456 = vshrl.u32 %v455, 7
        %v457 = vsub.s32 0, %v456
        %v458 = vrot.slane %v437, %v457
        %v460 = vmul.f32 %v453, %v458
        %v462 = vlaneseq
        %v463 = vshrl.u32 %v462, 7
        %v464 = vsub.s32 0, %v463
        %v465 = vrot.slane %v438, %v464
        %v467 = vadd.f32 %v460, %v465
        %v468 = vld [vmem:[%s1] sm:$0xff]
        %v469 = vld [vmem:[%s1 + $0x8] sm:$0xff]
        %v470 = vld [vmem:[%s1 + $0x10] sm:$0xff]
        %v471 = vld [vmem:[%s1 + $0x18] sm:$0xff]
        %v472 = vld [vmem:[%s1 + $0x20] sm:$0xff]
        %v473 = vld [vmem:[%s1 + $0x28] sm:$0xff]
        %v474 = vld [vmem:[%s1 + $0x30] sm:$0xff]
        %v475 = vld [vmem:[%s1 + $0x38] sm:$0xff]
        %v476 = vld [vmem:[%s1 + $0x40] sm:$0xff]
        %v477 = vld [vmem:[%s1 + $0x48] sm:$0xff]
        %v478 = vld [vmem:[%s1 + $0x50] sm:$0xff]
        %v479 = vld [vmem:[%s1 + $0x58] sm:$0xff]
        %v480 = vld [vmem:[%s1 + $0x60] sm:$0xff]
        %v481 = vld [vmem:[%s1 + $0x68] sm:$0xff]
        %v482 = vld [vmem:[%s1 + $0x70] sm:$0xff]
        %v483 = vld [vmem:[%s1 + $0x78] sm:$0xff]
        %v484 = vld [vmem:[%s1 + $0x80] sm:$0xff]
        %v485 = vld [vmem:[%s1 + $0x88] sm:$0xff]
        %v486 = vld [vmem:[%s1 + $0x90] sm:$0xff]
        %v487 = vld [vmem:[%s1 + $0x98] sm:$0xff]
        %v488 = vld [vmem:[%s1 + $0xa0] sm:$0xff]
        %v489 = vld [vmem:[%s1 + $0xa8] sm:$0xff]
        %v490 = vld [vmem:[%s1 + $0xb0] sm:$0xff]
        %v491 = vld [vmem:[%s1 + $0xb8] sm:$0xff]
        %v492 = vld [vmem:[%s1 + $0xc0] sm:$0xff]
        %v493 = vld [vmem:[%s1 + $0xc8] sm:$0xff]
        %v494 = vld [vmem:[%s1 + $0xd0] sm:$0xff]
        %v495 = vld [vmem:[%s1 + $0xd8] sm:$0xff]
        %v496 = vld [vmem:[%s1 + $0xe0] sm:$0xff]
        %v497 = vld [vmem:[%s1 + $0xe8] sm:$0xff]
        %v498 = vld [vmem:[%s1 + $0xf0] sm:$0xff]
        %v499 = vld [vmem:[%s1 + $0xf8] sm:$0xff]
        %v500 = vld [vmem:[%s1 + $0x100] sm:$0xff]
        %v501 = vld [vmem:[%s1 + $0x108] sm:$0xff]
        %v502 = vld [vmem:[%s1 + $0x110] sm:$0xff]
        %v503 = vld [vmem:[%s1 + $0x118] sm:$0xff]
        %v504 = vld [vmem:[%s1 + $0x120] sm:$0xff]
        %v505 = vld [vmem:[%s1 + $0x128] sm:$0xff]
        %v506 = vld [vmem:[%s1 + $0x130] sm:$0xff]
        %v507 = vld [vmem:[%s1 + $0x138] sm:$0xff]
        %v508 = vld [vmem:[%s1 + $0x140] sm:$0xff]
        %v509 = vld [vmem:[%s1 + $0x148] sm:$0xff]
        %v510 = vld [vmem:[%s1 + $0x150] sm:$0xff]
        %v511 = vld [vmem:[%s1 + $0x158] sm:$0xff]
        %v512 = vld [vmem:[%s1 + $0x160] sm:$0xff]
        %v513 = vld [vmem:[%s1 + $0x168] sm:$0xff]
        %v514 = vld [vmem:[%s1 + $0x170] sm:$0xff]
        %v515 = vld [vmem:[%s1 + $0x178] sm:$0xff]
        %v516 = vld [vmem:[%s2] sm:$0x1]
        %v517 = vld [vmem:[%s2 + $0x1] sm:$0x1]
        %v518 = vld [vmem:[%s2 + $0x2] sm:$0x1]
        %v519 = vld [vmem:[%s2 + $0x3] sm:$0x1]
        %v520 = vld [vmem:[%s2 + $0x4] sm:$0x1]
        %v521 = vld [vmem:[%s2 + $0x5] sm:$0x1]
        %v522 = vld [vmem:[%s2 + $0x6] sm:$0x1]
        %v523 = vld [vmem:[%s2 + $0x7] sm:$0x1]
        %v524 = vld [vmem:[%s2 + $0x8] sm:$0x1]
        %v525 = vld [vmem:[%s2 + $0x9] sm:$0x1]
        %v526 = vld [vmem:[%s2 + $0xa] sm:$0x1]
        %v527 = vld [vmem:[%s2 + $0xb] sm:$0x1]
        %v540 = vlaneseq
        %v541 = vshrl.u32 %v540, 7
        %v542 = vsub.s32 0, %v541
        %v543 = vrot.slane %v516, %v542
        %v544 = vlaneseq
        %v545 = vshrl.u32 %v544, 7
        %v546 = vsub.s32 0, %v545
        %v547 = vrot.slane %v517, %v546
        %v548 = vlaneseq
        %v549 = vshrl.u32 %v548, 7
        %v550 = vsub.s32 0, %v549
        %v551 = vrot.slane %v518, %v550
        %v552 = vlaneseq
        %v553 = vshrl.u32 %v552, 7
        %v554 = vsub.s32 0, %v553
        %v555 = vrot.slane %v519, %v554
        %v556 = vlaneseq
        %v557 = vshrl.u32 %v556, 7
        %v558 = vsub.s32 0, %v557
        %v559 = vrot.slane %v520, %v558
        %v560 = vlaneseq
        %v561 = vshrl.u32 %v560, 7
        %v562 = vsub.s32 0, %v561
        %v563 = vrot.slane %v521, %v562
        %v564 = vlaneseq
        %v565 = vshrl.u32 %v564, 7
        %v566 = vsub.s32 0, %v565
        %v567 = vrot.slane %v522, %v566
        %v568 = vlaneseq
        %v569 = vshrl.u32 %v568, 7
        %v570 = vsub.s32 0, %v569
        %v571 = vrot.slane %v523, %v570
        %v572 = vlaneseq
        %v573 = vshrl.u32 %v572, 7
        %v574 = vsub.s32 0, %v573
        %v575 = vrot.slane %v524, %v574
        %v576 = vlaneseq
        %v577 = vshrl.u32 %v576, 7
        %v578 = vsub.s32 0, %v577
        %v579 = vrot.slane %v525, %v578
        %v580 = vlaneseq
        %v581 = vshrl.u32 %v580, 7
        %v582 = vsub.s32 0, %v581
        %v583 = vrot.slane %v526, %v582
        %v584 = vlaneseq
        %v585 = vshrl.u32 %v584, 7
        %v586 = vsub.s32 0, %v585
        %v587 = vrot.slane %v527, %v586
        %v601 = vsel %vm439, %v467, 0
        %603 = vmatprep.subr.mxu0 0.0
        %604 = vmatpush1.msra.mxu0 %v468
        %605 = vmatprep.subr.mxu0 0.0
        %606 = vmatpush1.msra.mxu0 %v469
        %607 = vmatprep.subr.mxu0 0.0
        %608 = vmatpush1.msra.mxu0 %v470
        %609 = vmatprep.subr.mxu0 0.0
        %610 = vmatpush1.msra.mxu0 %v471
        %611 = vmatprep.subr.mxu0 0.0
        %612 = vmatpush1.msra.mxu0 0.0
        %613 = vmatprep.subr.mxu0 0.0
        %614 = vmatpush1.msra.mxu0 0.0
        %615 = vmatprep.subr.mxu0 0.0
        %616 = vmatpush1.msra.mxu0 0.0
        %617 = vmatprep.subr.mxu0 0.0
        %618 = vmatpush1.msra.mxu0 0.0
        %619 = vmatprep.subr.mxu0 0.0
        %620 = vmatpush1.msra.mxu0 0.0
        %621 = vmatprep.subr.mxu0 0.0
        %622 = vmatpush1.msra.mxu0 0.0
        %623 = vmatprep.subr.mxu0 0.0
        %624 = vmatpush1.msra.mxu0 0.0
        %625 = vmatprep.subr.mxu0 0.0
        %626 = vmatpush1.msra.mxu0 0.0
        %627 = vmatprep.subr.mxu0 0.0
        %628 = vmatpush1.msra.mxu0 0.0
        %629 = vmatprep.subr.mxu0 0.0
        %630 = vmatpush1.msra.mxu0 0.0
        %631 = vmatprep.subr.mxu0 0.0
        %632 = vmatpush1.msra.mxu0 0.0
        %633 = vmatprep.subr.mxu0 0.0
        %634 = vmatpush1.msra.mxu0 0.0
        %635 = vmatprep.subr.mxu0 0.0
        %636 = vmatpush1.msra.mxu0 0.0
        %637 = vmatprep.subr.mxu0 0.0
        %638 = vmatpush1.msra.mxu0 0.0
        %639 = vmatprep.subr.mxu0 0.0
        %640 = vmatpush1.msra.mxu0 0.0
        %641 = vmatprep.subr.mxu0 0.0
        %642 = vmatpush1.msra.mxu0 0.0
        %643 = vmatprep.subr.mxu0 0.0
        %644 = vmatpush1.msra.mxu0 0.0
        %645 = vmatprep.subr.mxu0 0.0
        %646 = vmatpush1.msra.mxu0 0.0
        %647 = vmatprep.subr.mxu0 0.0
        %648 = vmatpush1.msra.mxu0 0.0
        %649 = vmatprep.subr.mxu0 0.0
        %650 = vmatpush1.msra.mxu0 0.0
        %651 = vmatprep.subr.mxu0 0.0
        %652 = vmatpush1.msra.mxu0 0.0
        %653 = vmatprep.subr.mxu0 0.0
        %654 = vmatpush1.msra.mxu0 0.0
        %655 = vmatprep.subr.mxu0 0.0
        %656 = vmatpush1.msra.mxu0 0.0
        %657 = vmatprep.subr.mxu0 0.0
        %658 = vmatpush1.msra.mxu0 0.0
        %659 = vmatprep.subr.mxu0 0.0
        %660 = vmatpush1.msra.mxu0 0.0
        %661 = vmatprep.subr.mxu0 0.0
        %662 = vmatpush1.msra.mxu0 0.0
        %663 = vmatprep.subr.mxu0 0.0
        %664 = vmatpush1.msra.mxu0 0.0
        %665 = vmatprep.subr.mxu0 0.0
        %666 = vmatpush1.msra.mxu0 0.0
        %667 = vmatprep.mubr.f32.mxu0 0.0
        %668 = vmatmul.mubr.f32.gmra.mrb[0].mxu0 %v601
        %v669 = vpop.f32.mrb[0].mxu0
        %v670 = vadd.f32 %v543, %v669
        %v671 = vpop.f32.mrb[0].mxu0
        %672 = vdwg.mxu0
        %673 = vmatprep.subr.mxu0 0.0
        %674 = vmatpush1.msra.mxu0 %v472
        %675 = vmatprep.subr.mxu0 0.0
        %676 = vmatpush1.msra.mxu0 %v473
        %677 = vmatprep.subr.mxu0 0.0
        %678 = vmatpush1.msra.mxu0 %v474
        %679 = vmatprep.subr.mxu0 0.0
        %680 = vmatpush1.msra.mxu0 %v475
        %681 = vmatprep.subr.mxu0 0.0
        %682 = vmatpush1.msra.mxu0 0.0
        %683 = vmatprep.subr.mxu0 0.0
        %684 = vmatpush1.msra.mxu0 0.0
        %685 = vmatprep.subr.mxu0 0.0
        %686 = vmatpush1.msra.mxu0 0.0
        %687 = vmatprep.subr.mxu0 0.0
        %688 = vmatpush1.msra.mxu0 0.0
        %689 = vmatprep.subr.mxu0 0.0
        %690 = vmatpush1.msra.mxu0 0.0
        %691 = vmatprep.subr.mxu0 0.0
        %692 = vmatpush1.msra.mxu0 0.0
        %693 = vmatprep.subr.mxu0 0.0
        %694 = vmatpush1.msra.mxu0 0.0
        %695 = vmatprep.subr.mxu0 0.0
        %696 = vmatpush1.msra.mxu0 0.0
        %697 = vmatprep.subr.mxu0 0.0
        %698 = vmatpush1.msra.mxu0 0.0
        %699 = vmatprep.subr.mxu0 0.0
        %700 = vmatpush1.msra.mxu0 0.0
        %701 = vmatprep.subr.mxu0 0.0
        %702 = vmatpush1.msra.mxu0 0.0
        %703 = vmatprep.subr.mxu0 0.0
        %704 = vmatpush1.msra.mxu0 0.0
        %705 = vmatprep.subr.mxu0 0.0
        %706 = vmatpush1.msra.mxu0 0.0
        %707 = vmatprep.subr.mxu0 0.0
        %708 = vmatpush1.msra.mxu0 0.0
        %709 = vmatprep.subr.mxu0 0.0
        %710 = vmatpush1.msra.mxu0 0.0
        %711 = vmatprep.subr.mxu0 0.0
        %712 = vmatpush1.msra.mxu0 0.0
        %713 = vmatprep.subr.mxu0 0.0
        %714 = vmatpush1.msra.mxu0 0.0
        %715 = vmatprep.subr.mxu0 0.0
        %716 = vmatpush1.msra.mxu0 0.0
        %717 = vmatprep.subr.mxu0 0.0
        %718 = vmatpush1.msra.mxu0 0.0
        %719 = vmatprep.subr.mxu0 0.0
        %720 = vmatpush1.msra.mxu0 0.0
        %721 = vmatprep.subr.mxu0 0.0
        %722 = vmatpush1.msra.mxu0 0.0
        %723 = vmatprep.subr.mxu0 0.0
        %724 = vmatpush1.msra.mxu0 0.0
        %725 = vmatprep.subr.mxu0 0.0
        %726 = vmatpush1.msra.mxu0 0.0
        %727 = vmatprep.subr.mxu0 0.0
        %728 = vmatpush1.msra.mxu0 0.0
        %729 = vmatprep.subr.mxu0 0.0
        %730 = vmatpush1.msra.mxu0 0.0
        %731 = vmatprep.subr.mxu0 0.0
        %732 = vmatpush1.msra.mxu0 0.0
        %733 = vmatprep.subr.mxu0 0.0
        %734 = vmatpush1.msra.mxu0 0.0
        %735 = vmatprep.subr.mxu0 0.0
        %736 = vmatpush1.msra.mxu0 0.0
        %737 = vmatprep.mubr.f32.mxu0 0.0
        %738 = vmatmul.mubr.f32.gmra.mrb[0].mxu0 %v601
        %v739 = vpop.f32.mrb[0].mxu0
        %v740 = vadd.f32 %v547, %v739
        %v741 = vpop.f32.mrb[0].mxu0
        %742 = vdwg.mxu0
        %743 = vmatprep.subr.mxu0 0.0
        %744 = vmatpush1.msra.mxu0 %v476
        %745 = vmatprep.subr.mxu0 0.0
        %746 = vmatpush1.msra.mxu0 %v477
        %747 = vmatprep.subr.mxu0 0.0
        %748 = vmatpush1.msra.mxu0 %v478
        %749 = vmatprep.subr.mxu0 0.0
        %750 = vmatpush1.msra.mxu0 %v479
        %751 = vmatprep.subr.mxu0 0.0
        %752 = vmatpush1.msra.mxu0 0.0
        %753 = vmatprep.subr.mxu0 0.0
        %754 = vmatpush1.msra.mxu0 0.0
        %755 = vmatprep.subr.mxu0 0.0
        %756 = vmatpush1.msra.mxu0 0.0
        %757 = vmatprep.subr.mxu0 0.0
        %758 = vmatpush1.msra.mxu0 0.0
        %759 = vmatprep.subr.mxu0 0.0
        %760 = vmatpush1.msra.mxu0 0.0
        %761 = vmatprep.subr.mxu0 0.0
        %762 = vmatpush1.msra.mxu0 0.0
        %763 = vmatprep.subr.mxu0 0.0
        %764 = vmatpush1.msra.mxu0 0.0
        %765 = vmatprep.subr.mxu0 0.0
        %766 = vmatpush1.msra.mxu0 0.0
        %767 = vmatprep.subr.mxu0 0.0
        %768 = vmatpush1.msra.mxu0 0.0
        %769 = vmatprep.subr.mxu0 0.0
        %770 = vmatpush1.msra.mxu0 0.0
        %771 = vmatprep.subr.mxu0 0.0
        %772 = vmatpush1.msra.mxu0 0.0
        %773 = vmatprep.subr.mxu0 0.0
        %774 = vmatpush1.msra.mxu0 0.0
        %775 = vmatprep.subr.mxu0 0.0
        %776 = vmatpush1.msra.mxu0 0.0
        %777 = vmatprep.subr.mxu0 0.0
        %778 = vmatpush1.msra.mxu0 0.0
        %779 = vmatprep.subr.mxu0 0.0
        %780 = vmatpush1.msra.mxu0 0.0
        %781 = vmatprep.subr.mxu0 0.0
        %782 = vmatpush1.msra.mxu0 0.0
        %783 = vmatprep.subr.mxu0 0.0
        %784 = vmatpush1.msra.mxu0 0.0
        %785 = vmatprep.subr.mxu0 0.0
        %786 = vmatpush1.msra.mxu0 0.0
        %787 = vmatprep.subr.mxu0 0.0
        %788 = vmatpush1.msra.mxu0 0.0
        %789 = vmatprep.subr.mxu0 0.0
        %790 = vmatpush1.msra.mxu0 0.0
        %791 = vmatprep.subr.mxu0 0.0
        %792 = vmatpush1.msra.mxu0 0.0
        %793 = vmatprep.subr.mxu0 0.0
        %794 = vmatpush1.msra.mxu0 0.0
        %795 = vmatprep.subr.mxu0 0.0
        %796 = vmatpush1.msra.mxu0 0.0
        %797 = vmatprep.subr.mxu0 0.0
        %798 = vmatpush1.msra.mxu0 0.0
        %799 = vmatprep.subr.mxu0 0.0
        %800 = vmatpush1.msra.mxu0 0.0
        %801 = vmatprep.subr.mxu0 0.0
        %802 = vmatpush1.msra.mxu0 0.0
        %803 = vmatprep.subr.mxu0 0.0
        %804 = vmatpush1.msra.mxu0 0.0
        %805 = vmatprep.subr.mxu0 0.0
        %806 = vmatpush1.msra.mxu0 0.0
        %807 = vmatprep.mubr.f32.mxu0 0.0
        %808 = vmatmul.mubr.f32.gmra.mrb[0].mxu0 %v601
        %v809 = vpop.f32.mrb[0].mxu0
        %v810 = vadd.f32 %v551, %v809
        %v811 = vpop.f32.mrb[0].mxu0
        %812 = vdwg.mxu0
        %813 = vmatprep.subr.mxu0 0.0
        %814 = vmatpush1.msra.mxu0 %v480
        %815 = vmatprep.subr.mxu0 0.0
        %816 = vmatpush1.msra.mxu0 %v481
        %817 = vmatprep.subr.mxu0 0.0
        %818 = vmatpush1.msra.mxu0 %v482
        %819 = vmatprep.subr.mxu0 0.0
        %820 = vmatpush1.msra.mxu0 %v483
        %821 = vmatprep.subr.mxu0 0.0
        %822 = vmatpush1.msra.mxu0 0.0
        %823 = vmatprep.subr.mxu0 0.0
        %824 = vmatpush1.msra.mxu0 0.0
        %825 = vmatprep.subr.mxu0 0.0
        %826 = vmatpush1.msra.mxu0 0.0
        %827 = vmatprep.subr.mxu0 0.0
        %828 = vmatpush1.msra.mxu0 0.0
        %829 = vmatprep.subr.mxu0 0.0
        %830 = vmatpush1.msra.mxu0 0.0
        %831 = vmatprep.subr.mxu0 0.0
        %832 = vmatpush1.msra.mxu0 0.0
        %833 = vmatprep.subr.mxu0 0.0
        %834 = vmatpush1.msra.mxu0 0.0
        %835 = vmatprep.subr.mxu0 0.0
        %836 = vmatpush1.msra.mxu0 0.0
        %837 = vmatprep.subr.mxu0 0.0
        %838 = vmatpush1.msra.mxu0 0.0
        %839 = vmatprep.subr.mxu0 0.0
        %840 = vmatpush1.msra.mxu0 0.0
        %841 = vmatprep.subr.mxu0 0.0
        %842 = vmatpush1.msra.mxu0 0.0
        %843 = vmatprep.subr.mxu0 0.0
        %844 = vmatpush1.msra.mxu0 0.0
        %845 = vmatprep.subr.mxu0 0.0
        %846 = vmatpush1.msra.mxu0 0.0
        %847 = vmatprep.subr.mxu0 0.0
        %848 = vmatpush1.msra.mxu0 0.0
        %849 = vmatprep.subr.mxu0 0.0
        %850 = vmatpush1.msra.mxu0 0.0
        %851 = vmatprep.subr.mxu0 0.0
        %852 = vmatpush1.msra.mxu0 0.0
        %853 = vmatprep.subr.mxu0 0.0
        %854 = vmatpush1.msra.mxu0 0.0
        %855 = vmatprep.subr.mxu0 0.0
        %856 = vmatpush1.msra.mxu0 0.0
        %857 = vmatprep.subr.mxu0 0.0
        %858 = vmatpush1.msra.mxu0 0.0
        %859 = vmatprep.subr.mxu0 0.0
        %860 = vmatpush1.msra.mxu0 0.0
        %861 = vmatprep.subr.mxu0 0.0
        %862 = vmatpush1.msra.mxu0 0.0
        %863 = vmatprep.subr.mxu0 0.0
        %864 = vmatpush1.msra.mxu0 0.0
        %865 = vmatprep.subr.mxu0 0.0
        %866 = vmatpush1.msra.mxu0 0.0
        %867 = vmatprep.subr.mxu0 0.0
        %868 = vmatpush1.msra.mxu0 0.0
        %869 = vmatprep.subr.mxu0 0.0
        %870 = vmatpush1.msra.mxu0 0.0
        %871 = vmatprep.subr.mxu0 0.0
        %872 = vmatpush1.msra.mxu0 0.0
        %873 = vmatprep.subr.mxu0 0.0
        %874 = vmatpush1.msra.mxu0 0.0
        %875 = vmatprep.subr.mxu0 0.0
        %876 = vmatpush1.msra.mxu0 0.0
        %877 = vmatprep.mubr.f32.mxu0 0.0
        %878 = vmatmul.mubr.f32.gmra.mrb[0].mxu0 %v601
        %v879 = vpop.f32.mrb[0].mxu0
        %v880 = vadd.f32 %v555, %v879
        %v881 = vpop.f32.mrb[0].mxu0
        %882 = vdwg.mxu0
        %883 = vmatprep.subr.mxu0 0.0
        %884 = vmatpush1.msra.mxu0 %v484
        %885 = vmatprep.subr.mxu0 0.0
        %886 = vmatpush1.msra.mxu0 %v485
        %887 = vmatprep.subr.mxu0 0.0
        %888 = vmatpush1.msra.mxu0 %v486
        %889 = vmatprep.subr.mxu0 0.0
        %890 = vmatpush1.msra.mxu0 %v487
        %891 = vmatprep.subr.mxu0 0.0
        %892 = vmatpush1.msra.mxu0 0.0
        %893 = vmatprep.subr.mxu0 0.0
        %894 = vmatpush1.msra.mxu0 0.0
        %895 = vmatprep.subr.mxu0 0.0
        %896 = vmatpush1.msra.mxu0 0.0
        %897 = vmatprep.subr.mxu0 0.0
        %898 = vmatpush1.msra.mxu0 0.0
        %899 = vmatprep.subr.mxu0 0.0
        %900 = vmatpush1.msra.mxu0 0.0
        %901 = vmatprep.subr.mxu0 0.0
        %902 = vmatpush1.msra.mxu0 0.0
        %903 = vmatprep.subr.mxu0 0.0
        %904 = vmatpush1.msra.mxu0 0.0
        %905 = vmatprep.subr.mxu0 0.0
        %906 = vmatpush1.msra.mxu0 0.0
        %907 = vmatprep.subr.mxu0 0.0
        %908 = vmatpush1.msra.mxu0 0.0
        %909 = vmatprep.subr.mxu0 0.0
        %910 = vmatpush1.msra.mxu0 0.0
        %911 = vmatprep.subr.mxu0 0.0
        %912 = vmatpush1.msra.mxu0 0.0
        %913 = vmatprep.subr.mxu0 0.0
        %914 = vmatpush1.msra.mxu0 0.0
        %915 = vmatprep.subr.mxu0 0.0
        %916 = vmatpush1.msra.mxu0 0.0
        %917 = vmatprep.subr.mxu0 0.0
        %918 = vmatpush1.msra.mxu0 0.0
        %919 = vmatprep.subr.mxu0 0.0
        %920 = vmatpush1.msra.mxu0 0.0
        %921 = vmatprep.subr.mxu0 0.0
        %922 = vmatpush1.msra.mxu0 0.0
        %923 = vmatprep.subr.mxu0 0.0
        %924 = vmatpush1.msra.mxu0 0.0
        %925 = vmatprep.subr.mxu0 0.0
        %926 = vmatpush1.msra.mxu0 0.0
        %927 = vmatprep.subr.mxu0 0.0
        %928 = vmatpush1.msra.mxu0 0.0
        %929 = vmatprep.subr.mxu0 0.0
        %930 = vmatpush1.msra.mxu0 0.0
        %931 = vmatprep.subr.mxu0 0.0
        %932 = vmatpush1.msra.mxu0 0.0
        %933 = vmatprep.subr.mxu0 0.0
        %934 = vmatpush1.msra.mxu0 0.0
        %935 = vmatprep.subr.mxu0 0.0
        %936 = vmatpush1.msra.mxu0 0.0
        %937 = vmatprep.subr.mxu0 0.0
        %938 = vmatpush1.msra.mxu0 0.0
        %939 = vmatprep.subr.mxu0 0.0
        %940 = vmatpush1.msra.mxu0 0.0
        %941 = vmatprep.subr.mxu0 0.0
        %942 = vmatpush1.msra.mxu0 0.0
        %943 = vmatprep.subr.mxu0 0.0
        %944 = vmatpush1.msra.mxu0 0.0
        %945 = vmatprep.subr.mxu0 0.0
        %946 = vmatpush1.msra.mxu0 0.0
        %947 = vmatprep.mubr.f32.mxu0 0.0
        %948 = vmatmul.mubr.f32.gmra.mrb[0].mxu0 %v601
        %v949 = vpop.f32.mrb[0].mxu0
        %v950 = vadd.f32 %v559, %v949
        %v951 = vpop.f32.mrb[0].mxu0
        %952 = vdwg.mxu0
        %953 = vmatprep.subr.mxu0 0.0
        %954 = vmatpush1.msra.mxu0 %v488
        %955 = vmatprep.subr.mxu0 0.0
        %956 = vmatpush1.msra.mxu0 %v489
        %957 = vmatprep.subr.mxu0 0.0
        %958 = vmatpush1.msra.mxu0 %v490
        %959 = vmatprep.subr.mxu0 0.0
        %960 = vmatpush1.msra.mxu0 %v491
        %961 = vmatprep.subr.mxu0 0.0
        %962 = vmatpush1.msra.mxu0 0.0
        %963 = vmatprep.subr.mxu0 0.0
        %964 = vmatpush1.msra.mxu0 0.0
        %965 = vmatprep.subr.mxu0 0.0
        %966 = vmatpush1.msra.mxu0 0.0
        %967 = vmatprep.subr.mxu0 0.0
        %968 = vmatpush1.msra.mxu0 0.0
        %969 = vmatprep.subr.mxu0 0.0
        %970 = vmatpush1.msra.mxu0 0.0
        %971 = vmatprep.subr.mxu0 0.0
        %972 = vmatpush1.msra.mxu0 0.0
        %973 = vmatprep.subr.mxu0 0.0
        %974 = vmatpush1.msra.mxu0 0.0
        %975 = vmatprep.subr.mxu0 0.0
        %976 = vmatpush1.msra.mxu0 0.0
        %977 = vmatprep.subr.mxu0 0.0
        %978 = vmatpush1.msra.mxu0 0.0
        %979 = vmatprep.subr.mxu0 0.0
        %980 = vmatpush1.msra.mxu0 0.0
        %981 = vmatprep.subr.mxu0 0.0
        %982 = vmatpush1.msra.mxu0 0.0
        %983 = vmatprep.subr.mxu0 0.0
        %984 = vmatpush1.msra.mxu0 0.0
        %985 = vmatprep.subr.mxu0 0.0
        %986 = vmatpush1.msra.mxu0 0.0
        %987 = vmatprep.subr.mxu0 0.0
        %988 = vmatpush1.msra.mxu0 0.0
        %989 = vmatprep.subr.mxu0 0.0
        %990 = vmatpush1.msra.mxu0 0.0
        %991 = vmatprep.subr.mxu0 0.0
        %992 = vmatpush1.msra.mxu0 0.0
        %993 = vmatprep.subr.mxu0 0.0
        %994 = vmatpush1.msra.mxu0 0.0
        %995 = vmatprep.subr.mxu0 0.0
        %996 = vmatpush1.msra.mxu0 0.0
        %997 = vmatprep.subr.mxu0 0.0
        %998 = vmatpush1.msra.mxu0 0.0
        %999 = vmatprep.subr.mxu0 0.0
        %1000 = vmatpush1.msra.mxu0 0.0
        %1001 = vmatprep.subr.mxu0 0.0
        %1002 = vmatpush1.msra.mxu0 0.0
        %1003 = vmatprep.subr.mxu0 0.0
        %1004 = vmatpush1.msra.mxu0 0.0
        %1005 = vmatprep.subr.mxu0 0.0
        %1006 = vmatpush1.msra.mxu0 0.0
        %1007 = vmatprep.subr.mxu0 0.0
        %1008 = vmatpush1.msra.mxu0 0.0
        %1009 = vmatprep.subr.mxu0 0.0
        %1010 = vmatpush1.msra.mxu0 0.0
        %1011 = vmatprep.subr.mxu0 0.0
        %1012 = vmatpush1.msra.mxu0 0.0
        %1013 = vmatprep.subr.mxu0 0.0
        %1014 = vmatpush1.msra.mxu0 0.0
        %1015 = vmatprep.subr.mxu0 0.0
        %1016 = vmatpush1.msra.mxu0 0.0
        %1017 = vmatprep.mubr.f32.mxu0 0.0
        %1018 = vmatmul.mubr.f32.gmra.mrb[0].mxu0 %v601
        %v1019 = vpop.f32.mrb[0].mxu0
        %v1020 = vadd.f32 %v563, %v1019
        %v1021 = vpop.f32.mrb[0].mxu0
        %1022 = vdwg.mxu0
        %1023 = vmatprep.subr.mxu0 0.0
        %1024 = vmatpush1.msra.mxu0 %v492
        %1025 = vmatprep.subr.mxu0 0.0
        %1026 = vmatpush1.msra.mxu0 %v493
        %1027 = vmatprep.subr.mxu0 0.0
        %1028 = vmatpush1.msra.mxu0 %v494
        %1029 = vmatprep.subr.mxu0 0.0
        %1030 = vmatpush1.msra.mxu0 %v495
        %1031 = vmatprep.subr.mxu0 0.0
        %1032 = vmatpush1.msra.mxu0 0.0
        %1033 = vmatprep.subr.mxu0 0.0
        %1034 = vmatpush1.msra.mxu0 0.0
        %1035 = vmatprep.subr.mxu0 0.0
        %1036 = vmatpush1.msra.mxu0 0.0
        %1037 = vmatprep.subr.mxu0 0.0
        %1038 = vmatpush1.msra.mxu0 0.0
        %1039 = vmatprep.subr.mxu0 0.0
        %1040 = vmatpush1.msra.mxu0 0.0
        %1041 = vmatprep.subr.mxu0 0.0
        %1042 = vmatpush1.msra.mxu0 0.0
        %1043 = vmatprep.subr.mxu0 0.0
        %1044 = vmatpush1.msra.mxu0 0.0
        %1045 = vmatprep.subr.mxu0 0.0
        %1046 = vmatpush1.msra.mxu0 0.0
        %1047 = vmatprep.subr.mxu0 0.0
        %1048 = vmatpush1.msra.mxu0 0.0
        %1049 = vmatprep.subr.mxu0 0.0
        %1050 = vmatpush1.msra.mxu0 0.0
        %1051 = vmatprep.subr.mxu0 0.0
        %1052 = vmatpush1.msra.mxu0 0.0
        %1053 = vmatprep.subr.mxu0 0.0
        %1054 = vmatpush1.msra.mxu0 0.0
        %1055 = vmatprep.subr.mxu0 0.0
        %1056 = vmatpush1.msra.mxu0 0.0
        %1057 = vmatprep.subr.mxu0 0.0
        %1058 = vmatpush1.msra.mxu0 0.0
        %1059 = vmatprep.subr.mxu0 0.0
        %1060 = vmatpush1.msra.mxu0 0.0
        %1061 = vmatprep.subr.mxu0 0.0
        %1062 = vmatpush1.msra.mxu0 0.0
        %1063 = vmatprep.subr.mxu0 0.0
        %1064 = vmatpush1.msra.mxu0 0.0
        %1065 = vmatprep.subr.mxu0 0.0
        %1066 = vmatpush1.msra.mxu0 0.0
        %1067 = vmatprep.subr.mxu0 0.0
        %1068 = vmatpush1.msra.mxu0 0.0
        %1069 = vmatprep.subr.mxu0 0.0
        %1070 = vmatpush1.msra.mxu0 0.0
        %1071 = vmatprep.subr.mxu0 0.0
        %1072 = vmatpush1.msra.mxu0 0.0
        %1073 = vmatprep.subr.mxu0 0.0
        %1074 = vmatpush1.msra.mxu0 0.0
        %1075 = vmatprep.subr.mxu0 0.0
        %1076 = vmatpush1.msra.mxu0 0.0
        %1077 = vmatprep.subr.mxu0 0.0
        %1078 = vmatpush1.msra.mxu0 0.0
        %1079 = vmatprep.subr.mxu0 0.0
        %1080 = vmatpush1.msra.mxu0 0.0
        %1081 = vmatprep.subr.mxu0 0.0
        %1082 = vmatpush1.msra.mxu0 0.0
        %1083 = vmatprep.subr.mxu0 0.0
        %1084 = vmatpush1.msra.mxu0 0.0
        %1085 = vmatprep.subr.mxu0 0.0
        %1086 = vmatpush1.msra.mxu0 0.0
        %1087 = vmatprep.mubr.f32.mxu0 0.0
        %1088 = vmatmul.mubr.f32.gmra.mrb[0].mxu0 %v601
        %v1089 = vpop.f32.mrb[0].mxu0
        %v1090 = vadd.f32 %v567, %v1089
        %v1091 = vpop.f32.mrb[0].mxu0
        %1092 = vdwg.mxu0
        %1093 = vmatprep.subr.mxu0 0.0
        %1094 = vmatpush1.msra.mxu0 %v496
        %1095 = vmatprep.subr.mxu0 0.0
        %1096 = vmatpush1.msra.mxu0 %v497
        %1097 = vmatprep.subr.mxu0 0.0
        %1098 = vmatpush1.msra.mxu0 %v498
        %1099 = vmatprep.subr.mxu0 0.0
        %1100 = vmatpush1.msra.mxu0 %v499
        %1101 = vmatprep.subr.mxu0 0.0
        %1102 = vmatpush1.msra.mxu0 0.0
        %1103 = vmatprep.subr.mxu0 0.0
        %1104 = vmatpush1.msra.mxu0 0.0
        %1105 = vmatprep.subr.mxu0 0.0
        %1106 = vmatpush1.msra.mxu0 0.0
        %1107 = vmatprep.subr.mxu0 0.0
        %1108 = vmatpush1.msra.mxu0 0.0
        %1109 = vmatprep.subr.mxu0 0.0
        %1110 = vmatpush1.msra.mxu0 0.0
        %1111 = vmatprep.subr.mxu0 0.0
        %1112 = vmatpush1.msra.mxu0 0.0
        %1113 = vmatprep.subr.mxu0 0.0
        %1114 = vmatpush1.msra.mxu0 0.0
        %1115 = vmatprep.subr.mxu0 0.0
        %1116 = vmatpush1.msra.mxu0 0.0
        %1117 = vmatprep.subr.mxu0 0.0
        %1118 = vmatpush1.msra.mxu0 0.0
        %1119 = vmatprep.subr.mxu0 0.0
        %1120 = vmatpush1.msra.mxu0 0.0
        %1121 = vmatprep.subr.mxu0 0.0
        %1122 = vmatpush1.msra.mxu0 0.0
        %1123 = vmatprep.subr.mxu0 0.0
        %1124 = vmatpush1.msra.mxu0 0.0
        %1125 = vmatprep.subr.mxu0 0.0
        %1126 = vmatpush1.msra.mxu0 0.0
        %1127 = vmatprep.subr.mxu0 0.0
        %1128 = vmatpush1.msra.mxu0 0.0
        %1129 = vmatprep.subr.mxu0 0.0
        %1130 = vmatpush1.msra.mxu0 0.0
        %1131 = vmatprep.subr.mxu0 0.0
        %1132 = vmatpush1.msra.mxu0 0.0
        %1133 = vmatprep.subr.mxu0 0.0
        %1134 = vmatpush1.msra.mxu0 0.0
        %1135 = vmatprep.subr.mxu0 0.0
        %1136 = vmatpush1.msra.mxu0 0.0
        %1137 = vmatprep.subr.mxu0 0.0
        %1138 = vmatpush1.msra.mxu0 0.0
        %1139 = vmatprep.subr.mxu0 0.0
        %1140 = vmatpush1.msra.mxu0 0.0
        %1141 = vmatprep.subr.mxu0 0.0
        %1142 = vmatpush1.msra.mxu0 0.0
        %1143 = vmatprep.subr.mxu0 0.0
        %1144 = vmatpush1.msra.mxu0 0.0
        %1145 = vmatprep.subr.mxu0 0.0
        %1146 = vmatpush1.msra.mxu0 0.0
        %1147 = vmatprep.subr.mxu0 0.0
        %1148 = vmatpush1.msra.mxu0 0.0
        %1149 = vmatprep.subr.mxu0 0.0
        %1150 = vmatpush1.msra.mxu0 0.0
        %1151 = vmatprep.subr.mxu0 0.0
        %1152 = vmatpush1.msra.mxu0 0.0
        %1153 = vmatprep.subr.mxu0 0.0
        %1154 = vmatpush1.msra.mxu0 0.0
        %1155 = vmatprep.subr.mxu0 0.0
        %1156 = vmatpush1.msra.mxu0 0.0
        %1157 = vmatprep.mubr.f32.mxu0 0.0
        %1158 = vmatmul.mubr.f32.gmra.mrb[0].mxu0 %v601
        %v1159 = vpop.f32.mrb[0].mxu0
        %v1160 = vadd.f32 %v571, %v1159
        %v1161 = vpop.f32.mrb[0].mxu0
        %1162 = vdwg.mxu0
        %1163 = vmatprep.subr.mxu0 0.0
        %1164 = vmatpush1.msra.mxu0 %v500
        %1165 = vmatprep.subr.mxu0 0.0
        %1166 = vmatpush1.msra.mxu0 %v501
        %1167 = vmatprep.subr.mxu0 0.0
        %1168 = vmatpush1.msra.mxu0 %v502
        %1169 = vmatprep.subr.mxu0 0.0
        %1170 = vmatpush1.msra.mxu0 %v503
        %1171 = vmatprep.subr.mxu0 0.0
        %1172 = vmatpush1.msra.mxu0 0.0
        %1173 = vmatprep.subr.mxu0 0.0
        %1174 = vmatpush1.msra.mxu0 0.0
        %1175 = vmatprep.subr.mxu0 0.0
        %1176 = vmatpush1.msra.mxu0 0.0
        %1177 = vmatprep.subr.mxu0 0.0
        %1178 = vmatpush1.msra.mxu0 0.0
        %1179 = vmatprep.subr.mxu0 0.0
        %1180 = vmatpush1.msra.mxu0 0.0
        %1181 = vmatprep.subr.mxu0 0.0
        %1182 = vmatpush1.msra.mxu0 0.0
        %1183 = vmatprep.subr.mxu0 0.0
        %1184 = vmatpush1.msra.mxu0 0.0
        %1185 = vmatprep.subr.mxu0 0.0
        %1186 = vmatpush1.msra.mxu0 0.0
        %1187 = vmatprep.subr.mxu0 0.0
        %1188 = vmatpush1.msra.mxu0 0.0
        %1189 = vmatprep.subr.mxu0 0.0
        %1190 = vmatpush1.msra.mxu0 0.0
        %1191 = vmatprep.subr.mxu0 0.0
        %1192 = vmatpush1.msra.mxu0 0.0
        %1193 = vmatprep.subr.mxu0 0.0
        %1194 = vmatpush1.msra.mxu0 0.0
        %1195 = vmatprep.subr.mxu0 0.0
        %1196 = vmatpush1.msra.mxu0 0.0
        %1197 = vmatprep.subr.mxu0 0.0
        %1198 = vmatpush1.msra.mxu0 0.0
        %1199 = vmatprep.subr.mxu0 0.0
        %1200 = vmatpush1.msra.mxu0 0.0
        %1201 = vmatprep.subr.mxu0 0.0
        %1202 = vmatpush1.msra.mxu0 0.0
        %1203 = vmatprep.subr.mxu0 0.0
        %1204 = vmatpush1.msra.mxu0 0.0
        %1205 = vmatprep.subr.mxu0 0.0
        %1206 = vmatpush1.msra.mxu0 0.0
        %1207 = vmatprep.subr.mxu0 0.0
        %1208 = vmatpush1.msra.mxu0 0.0
        %1209 = vmatprep.subr.mxu0 0.0
        %1210 = vmatpush1.msra.mxu0 0.0
        %1211 = vmatprep.subr.mxu0 0.0
        %1212 = vmatpush1.msra.mxu0 0.0
        %1213 = vmatprep.subr.mxu0 0.0
        %1214 = vmatpush1.msra.mxu0 0.0
        %1215 = vmatprep.subr.mxu0 0.0
        %1216 = vmatpush1.msra.mxu0 0.0
        %1217 = vmatprep.subr.mxu0 0.0
        %1218 = vmatpush1.msra.mxu0 0.0
        %1219 = vmatprep.subr.mxu0 0.0
        %1220 = vmatpush1.msra.mxu0 0.0
        %1221 = vmatprep.subr.mxu0 0.0
        %1222 = vmatpush1.msra.mxu0 0.0
        %1223 = vmatprep.subr.mxu0 0.0
        %1224 = vmatpush1.msra.mxu0 0.0
        %1225 = vmatprep.subr.mxu0 0.0
        %1226 = vmatpush1.msra.mxu0 0.0
        %1227 = vmatprep.mubr.f32.mxu0 0.0
        %1228 = vmatmul.mubr.f32.gmra.mrb[0].mxu0 %v601
        %v1229 = vpop.f32.mrb[0].mxu0
        %v1230 = vadd.f32 %v575, %v1229
        %v1231 = vpop.f32.mrb[0].mxu0
        %1232 = vdwg.mxu0
        %1233 = vmatprep.subr.mxu0 0.0
        %1234 = vmatpush1.msra.mxu0 %v504
        %1235 = vmatprep.subr.mxu0 0.0
        %1236 = vmatpush1.msra.mxu0 %v505
        %1237 = vmatprep.subr.mxu0 0.0
        %1238 = vmatpush1.msra.mxu0 %v506
        %1239 = vmatprep.subr.mxu0 0.0
        %1240 = vmatpush1.msra.mxu0 %v507
        %1241 = vmatprep.subr.mxu0 0.0
        %1242 = vmatpush1.msra.mxu0 0.0
        %1243 = vmatprep.subr.mxu0 0.0
        %1244 = vmatpush1.msra.mxu0 0.0
        %1245 = vmatprep.subr.mxu0 0.0
        %1246 = vmatpush1.msra.mxu0 0.0
        %1247 = vmatprep.subr.mxu0 0.0
        %1248 = vmatpush1.msra.mxu0 0.0
        %1249 = vmatprep.subr.mxu0 0.0
        %1250 = vmatpush1.msra.mxu0 0.0
        %1251 = vmatprep.subr.mxu0 0.0
        %1252 = vmatpush1.msra.mxu0 0.0
        %1253 = vmatprep.subr.mxu0 0.0
        %1254 = vmatpush1.msra.mxu0 0.0
        %1255 = vmatprep.subr.mxu0 0.0
        %1256 = vmatpush1.msra.mxu0 0.0
        %1257 = vmatprep.subr.mxu0 0.0
        %1258 = vmatpush1.msra.mxu0 0.0
        %1259 = vmatprep.subr.mxu0 0.0
        %1260 = vmatpush1.msra.mxu0 0.0
        %1261 = vmatprep.subr.mxu0 0.0
        %1262 = vmatpush1.msra.mxu0 0.0
        %1263 = vmatprep.subr.mxu0 0.0
        %1264 = vmatpush1.msra.mxu0 0.0
        %1265 = vmatprep.subr.mxu0 0.0
        %1266 = vmatpush1.msra.mxu0 0.0
        %1267 = vmatprep.subr.mxu0 0.0
        %1268 = vmatpush1.msra.mxu0 0.0
        %1269 = vmatprep.subr.mxu0 0.0
        %1270 = vmatpush1.msra.mxu0 0.0
        %1271 = vmatprep.subr.mxu0 0.0
        %1272 = vmatpush1.msra.mxu0 0.0
        %1273 = vmatprep.subr.mxu0 0.0
        %1274 = vmatpush1.msra.mxu0 0.0
        %1275 = vmatprep.subr.mxu0 0.0
        %1276 = vmatpush1.msra.mxu0 0.0
        %1277 = vmatprep.subr.mxu0 0.0
        %1278 = vmatpush1.msra.mxu0 0.0
        %1279 = vmatprep.subr.mxu0 0.0
        %1280 = vmatpush1.msra.mxu0 0.0
        %1281 = vmatprep.subr.mxu0 0.0
        %1282 = vmatpush1.msra.mxu0 0.0
        %1283 = vmatprep.subr.mxu0 0.0
        %1284 = vmatpush1.msra.mxu0 0.0
        %1285 = vmatprep.subr.mxu0 0.0
        %1286 = vmatpush1.msra.mxu0 0.0
        %1287 = vmatprep.subr.mxu0 0.0
        %1288 = vmatpush1.msra.mxu0 0.0
        %1289 = vmatprep.subr.mxu0 0.0
        %1290 = vmatpush1.msra.mxu0 0.0
        %1291 = vmatprep.subr.mxu0 0.0
        %1292 = vmatpush1.msra.mxu0 0.0
        %1293 = vmatprep.subr.mxu0 0.0
        %1294 = vmatpush1.msra.mxu0 0.0
        %1295 = vmatprep.subr.mxu0 0.0
        %1296 = vmatpush1.msra.mxu0 0.0
        %1297 = vmatprep.mubr.f32.mxu0 0.0
        %1298 = vmatmul.mubr.f32.gmra.mrb[0].mxu0 %v601
        %v1299 = vpop.f32.mrb[0].mxu0
        %v1300 = vadd.f32 %v579, %v1299
        %v1301 = vpop.f32.mrb[0].mxu0
        %1302 = vdwg.mxu0
        %1303 = vmatprep.subr.mxu0 0.0
        %1304 = vmatpush1.msra.mxu0 %v508
        %1305 = vmatprep.subr.mxu0 0.0
        %1306 = vmatpush1.msra.mxu0 %v509
        %1307 = vmatprep.subr.mxu0 0.0
        %1308 = vmatpush1.msra.mxu0 %v510
        %1309 = vmatprep.subr.mxu0 0.0
        %1310 = vmatpush1.msra.mxu0 %v511
        %1311 = vmatprep.subr.mxu0 0.0
        %1312 = vmatpush1.msra.mxu0 0.0
        %1313 = vmatprep.subr.mxu0 0.0
        %1314 = vmatpush1.msra.mxu0 0.0
        %1315 = vmatprep.subr.mxu0 0.0
        %1316 = vmatpush1.msra.mxu0 0.0
        %1317 = vmatprep.subr.mxu0 0.0
        %1318 = vmatpush1.msra.mxu0 0.0
        %1319 = vmatprep.subr.mxu0 0.0
        %1320 = vmatpush1.msra.mxu0 0.0
        %1321 = vmatprep.subr.mxu0 0.0
        %1322 = vmatpush1.msra.mxu0 0.0
        %1323 = vmatprep.subr.mxu0 0.0
        %1324 = vmatpush1.msra.mxu0 0.0
        %1325 = vmatprep.subr.mxu0 0.0
        %1326 = vmatpush1.msra.mxu0 0.0
        %1327 = vmatprep.subr.mxu0 0.0
        %1328 = vmatpush1.msra.mxu0 0.0
        %1329 = vmatprep.subr.mxu0 0.0
        %1330 = vmatpush1.msra.mxu0 0.0
        %1331 = vmatprep.subr.mxu0 0.0
        %1332 = vmatpush1.msra.mxu0 0.0
        %1333 = vmatprep.subr.mxu0 0.0
        %1334 = vmatpush1.msra.mxu0 0.0
        %1335 = vmatprep.subr.mxu0 0.0
        %1336 = vmatpush1.msra.mxu0 0.0
        %1337 = vmatprep.subr.mxu0 0.0
        %1338 = vmatpush1.msra.mxu0 0.0
        %1339 = vmatprep.subr.mxu0 0.0
        %1340 = vmatpush1.msra.mxu0 0.0
        %1341 = vmatprep.subr.mxu0 0.0
        %1342 = vmatpush1.msra.mxu0 0.0
        %1343 = vmatprep.subr.mxu0 0.0
        %1344 = vmatpush1.msra.mxu0 0.0
        %1345 = vmatprep.subr.mxu0 0.0
        %1346 = vmatpush1.msra.mxu0 0.0
        %1347 = vmatprep.subr.mxu0 0.0
        %1348 = vmatpush1.msra.mxu0 0.0
        %1349 = vmatprep.subr.mxu0 0.0
        %1350 = vmatpush1.msra.mxu0 0.0
        %1351 = vmatprep.subr.mxu0 0.0
        %1352 = vmatpush1.msra.mxu0 0.0
        %1353 = vmatprep.subr.mxu0 0.0
        %1354 = vmatpush1.msra.mxu0 0.0
        %1355 = vmatprep.subr.mxu0 0.0
        %1356 = vmatpush1.msra.mxu0 0.0
        %1357 = vmatprep.subr.mxu0 0.0
        %1358 = vmatpush1.msra.mxu0 0.0
        %1359 = vmatprep.subr.mxu0 0.0
        %1360 = vmatpush1.msra.mxu0 0.0
        %1361 = vmatprep.subr.mxu0 0.0
        %1362 = vmatpush1.msra.mxu0 0.0
        %1363 = vmatprep.subr.mxu0 0.0
        %1364 = vmatpush1.msra.mxu0 0.0
        %1365 = vmatprep.subr.mxu0 0.0
        %1366 = vmatpush1.msra.mxu0 0.0
        %1367 = vmatprep.mubr.f32.mxu0 0.0
        %1368 = vmatmul.mubr.f32.gmra.mrb[0].mxu0 %v601
        %v1369 = vpop.f32.mrb[0].mxu0
        %v1370 = vadd.f32 %v583, %v1369
        %v1371 = vpop.f32.mrb[0].mxu0
        %1372 = vdwg.mxu0
        %1373 = vmatprep.subr.mxu0 0.0
        %1374 = vmatpush1.msra.mxu0 %v512
        %1375 = vmatprep.subr.mxu0 0.0
        %1376 = vmatpush1.msra.mxu0 %v513
        %1377 = vmatprep.subr.mxu0 0.0
        %1378 = vmatpush1.msra.mxu0 %v514
        %1379 = vmatprep.subr.mxu0 0.0
        %1380 = vmatpush1.msra.mxu0 %v515
        %1381 = vmatprep.subr.mxu0 0.0
        %1382 = vmatpush1.msra.mxu0 0.0
        %1383 = vmatprep.subr.mxu0 0.0
        %1384 = vmatpush1.msra.mxu0 0.0
        %1385 = vmatprep.subr.mxu0 0.0
        %1386 = vmatpush1.msra.mxu0 0.0
        %1387 = vmatprep.subr.mxu0 0.0
        %1388 = vmatpush1.msra.mxu0 0.0
        %1389 = vmatprep.subr.mxu0 0.0
        %1390 = vmatpush1.msra.mxu0 0.0
        %1391 = vmatprep.subr.mxu0 0.0
        %1392 = vmatpush1.msra.mxu0 0.0
        %1393 = vmatprep.subr.mxu0 0.0
        %1394 = vmatpush1.msra.mxu0 0.0
        %1395 = vmatprep.subr.mxu0 0.0
        %1396 = vmatpush1.msra.mxu0 0.0
        %1397 = vmatprep.subr.mxu0 0.0
        %1398 = vmatpush1.msra.mxu0 0.0
        %1399 = vmatprep.subr.mxu0 0.0
        %1400 = vmatpush1.msra.mxu0 0.0
        %1401 = vmatprep.subr.mxu0 0.0
        %1402 = vmatpush1.msra.mxu0 0.0
        %1403 = vmatprep.subr.mxu0 0.0
        %1404 = vmatpush1.msra.mxu0 0.0
        %1405 = vmatprep.subr.mxu0 0.0
        %1406 = vmatpush1.msra.mxu0 0.0
        %1407 = vmatprep.subr.mxu0 0.0
        %1408 = vmatpush1.msra.mxu0 0.0
        %1409 = vmatprep.subr.mxu0 0.0
        %1410 = vmatpush1.msra.mxu0 0.0
        %1411 = vmatprep.subr.mxu0 0.0
        %1412 = vmatpush1.msra.mxu0 0.0
        %1413 = vmatprep.subr.mxu0 0.0
        %1414 = vmatpush1.msra.mxu0 0.0
        %1415 = vmatprep.subr.mxu0 0.0
        %1416 = vmatpush1.msra.mxu0 0.0
        %1417 = vmatprep.subr.mxu0 0.0
        %1418 = vmatpush1.msra.mxu0 0.0
        %1419 = vmatprep.subr.mxu0 0.0
        %1420 = vmatpush1.msra.mxu0 0.0
        %1421 = vmatprep.subr.mxu0 0.0
        %1422 = vmatpush1.msra.mxu0 0.0
        %1423 = vmatprep.subr.mxu0 0.0
        %1424 = vmatpush1.msra.mxu0 0.0
        %1425 = vmatprep.subr.mxu0 0.0
        %1426 = vmatpush1.msra.mxu0 0.0
        %1427 = vmatprep.subr.mxu0 0.0
        %1428 = vmatpush1.msra.mxu0 0.0
        %1429 = vmatprep.subr.mxu0 0.0
        %1430 = vmatpush1.msra.mxu0 0.0
        %1431 = vmatprep.subr.mxu0 0.0
        %1432 = vmatpush1.msra.mxu0 0.0
        %1433 = vmatprep.subr.mxu0 0.0
        %1434 = vmatpush1.msra.mxu0 0.0
        %1435 = vmatprep.subr.mxu0 0.0
        %1436 = vmatpush1.msra.mxu0 0.0
        %1437 = vmatprep.mubr.f32.mxu0 0.0
        %1438 = vmatmul.mubr.f32.gmra.mrb[0].mxu0 %v601
        %v1439 = vpop.f32.mrb[0].mxu0
        %v1440 = vadd.f32 %v587, %v1439
        %v1441 = vpop.f32.mrb[0].mxu0
        %1442 = vdwg.mxu0
        %v1443 = vmul.f32 %v670, 0.35355338
        %v1444 = vmul.f32 %v740, 0.35355338
        %v1445 = vmul.f32 %v810, 0.35355338
        %v1446 = vmul.f32 %v880, 0.35355338
        %vm1447 = vcmask 64512
        %v1449 = vsel %vm1447, %v1443, 0
        %v1452 = vsel %vm1447, %v950, 0
        %1454 = vmatprep.subr.mxu0 0.0
        %1455 = vmatpush1.xpose.msra.mxu0 %v1452
        %1456 = vmatprep.subr.mxu0 0.0
        %1457 = vmatpush1.xpose.msra.mxu0 0.0
        %1458 = vmatprep.subr.mxu0 0.0
        %1459 = vmatpush1.xpose.msra.mxu0 0.0
        %1460 = vmatprep.subr.mxu0 0.0
        %1461 = vmatpush1.xpose.msra.mxu0 0.0
        %1462 = vmatprep.subr.mxu0 0.0
        %1463 = vmatpush1.xpose.msra.mxu0 0.0
        %1464 = vmatprep.subr.mxu0 0.0
        %1465 = vmatpush1.xpose.msra.mxu0 0.0
        %1466 = vmatprep.subr.mxu0 0.0
        %1467 = vmatpush1.xpose.msra.mxu0 0.0
        %1468 = vmatprep.subr.mxu0 0.0
        %1469 = vmatpush1.xpose.msra.mxu0 0.0
        %1470 = vmatprep.subr.mxu0 0.0
        %1471 = vmatpush1.xpose.msra.mxu0 0.0
        %1472 = vmatprep.subr.mxu0 0.0
        %1473 = vmatpush1.xpose.msra.mxu0 0.0
        %1474 = vmatprep.subr.mxu0 0.0
        %1475 = vmatpush1.xpose.msra.mxu0 0.0
        %1476 = vmatprep.subr.mxu0 0.0
        %1477 = vmatpush1.xpose.msra.mxu0 0.0
        %1478 = vmatprep.subr.mxu0 0.0
        %1479 = vmatpush1.xpose.msra.mxu0 0.0
        %1480 = vmatprep.subr.mxu0 0.0
        %1481 = vmatpush1.xpose.msra.mxu0 0.0
        %1482 = vmatprep.subr.mxu0 0.0
        %1483 = vmatpush1.xpose.msra.mxu0 0.0
        %1484 = vmatprep.subr.mxu0 0.0
        %1485 = vmatpush1.xpose.msra.mxu0 0.0
        %1486 = vmatprep.subr.mxu0 0.0
        %1487 = vmatpush1.xpose.msra.mxu0 0.0
        %1488 = vmatprep.subr.mxu0 0.0
        %1489 = vmatpush1.xpose.msra.mxu0 0.0
        %1490 = vmatprep.subr.mxu0 0.0
        %1491 = vmatpush1.xpose.msra.mxu0 0.0
        %1492 = vmatprep.subr.mxu0 0.0
        %1493 = vmatpush1.xpose.msra.mxu0 0.0
        %1494 = vmatprep.subr.mxu0 0.0
        %1495 = vmatpush1.xpose.msra.mxu0 0.0
        %1496 = vmatprep.subr.mxu0 0.0
        %1497 = vmatpush1.xpose.msra.mxu0 0.0
        %1498 = vmatprep.subr.mxu0 0.0
        %1499 = vmatpush1.xpose.msra.mxu0 0.0
        %1500 = vmatprep.subr.mxu0 0.0
        %1501 = vmatpush1.xpose.msra.mxu0 0.0
        %1502 = vmatprep.subr.mxu0 0.0
        %1503 = vmatpush1.xpose.msra.mxu0 0.0
        %1504 = vmatprep.subr.mxu0 0.0
        %1505 = vmatpush1.xpose.msra.mxu0 0.0
        %1506 = vmatprep.subr.mxu0 0.0
        %1507 = vmatpush1.xpose.msra.mxu0 0.0
        %1508 = vmatprep.subr.mxu0 0.0
        %1509 = vmatpush1.xpose.msra.mxu0 0.0
        %1510 = vmatprep.subr.mxu0 0.0
        %1511 = vmatpush1.xpose.msra.mxu0 0.0
        %1512 = vmatprep.subr.mxu0 0.0
        %1513 = vmatpush1.xpose.msra.mxu0 0.0
        %1514 = vmatprep.subr.mxu0 0.0
        %1515 = vmatpush1.xpose.msra.mxu0 0.0
        %1516 = vmatprep.subr.mxu0 0.0
        %1517 = vmatpush1.xpose.msra.mxu0 0.0
        %1518 = vmatprep.mubr.f32.mxu0 0.0
        %1519 = vmatmul.mubr.f32.gmra.mrb[0].mxu0 %v1449
        %v1520 = vpop.f32.mrb[0].mxu0
        %v1521 = vadd.f32 0.0, %v1520
        %v1522 = vpop.f32.mrb[0].mxu0
        %1523 = vdwg.mxu0
        %v1525 = vsel %vm1447, %v1444, 0
        %v1528 = vsel %vm1447, %v1020, 0
        %1530 = vmatprep.subr.mxu0 0.0
        %1531 = vmatpush1.xpose.msra.mxu0 %v1528
        %1532 = vmatprep.subr.mxu0 0.0
        %1533 = vmatpush1.xpose.msra.mxu0 0.0
        %1534 = vmatprep.subr.mxu0 0.0
        %1535 = vmatpush1.xpose.msra.mxu0 0.0
        %1536 = vmatprep.subr.mxu0 0.0
        %1537 = vmatpush1.xpose.msra.mxu0 0.0
        %1538 = vmatprep.subr.mxu0 0.0
        %1539 = vmatpush1.xpose.msra.mxu0 0.0
        %1540 = vmatprep.subr.mxu0 0.0
        %1541 = vmatpush1.xpose.msra.mxu0 0.0
        %1542 = vmatprep.subr.mxu0 0.0
        %1543 = vmatpush1.xpose.msra.mxu0 0.0
        %1544 = vmatprep.subr.mxu0 0.0
        %1545 = vmatpush1.xpose.msra.mxu0 0.0
        %1546 = vmatprep.subr.mxu0 0.0
        %1547 = vmatpush1.xpose.msra.mxu0 0.0
        %1548 = vmatprep.subr.mxu0 0.0
        %1549 = vmatpush1.xpose.msra.mxu0 0.0
        %1550 = vmatprep.subr.mxu0 0.0
        %1551 = vmatpush1.xpose.msra.mxu0 0.0
        %1552 = vmatprep.subr.mxu0 0.0
        %1553 = vmatpush1.xpose.msra.mxu0 0.0
        %1554 = vmatprep.subr.mxu0 0.0
        %1555 = vmatpush1.xpose.msra.mxu0 0.0
        %1556 = vmatprep.subr.mxu0 0.0
        %1557 = vmatpush1.xpose.msra.mxu0 0.0
        %1558 = vmatprep.subr.mxu0 0.0
        %1559 = vmatpush1.xpose.msra.mxu0 0.0
        %1560 = vmatprep.subr.mxu0 0.0
        %1561 = vmatpush1.xpose.msra.mxu0 0.0
        %1562 = vmatprep.subr.mxu0 0.0
        %1563 = vmatpush1.xpose.msra.mxu0 0.0
        %1564 = vmatprep.subr.mxu0 0.0
        %1565 = vmatpush1.xpose.msra.mxu0 0.0
        %1566 = vmatprep.subr.mxu0 0.0
        %1567 = vmatpush1.xpose.msra.mxu0 0.0
        %1568 = vmatprep.subr.mxu0 0.0
        %1569 = vmatpush1.xpose.msra.mxu0 0.0
        %1570 = vmatprep.subr.mxu0 0.0
        %1571 = vmatpush1.xpose.msra.mxu0 0.0
        %1572 = vmatprep.subr.mxu0 0.0
        %1573 = vmatpush1.xpose.msra.mxu0 0.0
        %1574 = vmatprep.subr.mxu0 0.0
        %1575 = vmatpush1.xpose.msra.mxu0 0.0
        %1576 = vmatprep.subr.mxu0 0.0
        %1577 = vmatpush1.xpose.msra.mxu0 0.0
        %1578 = vmatprep.subr.mxu0 0.0
        %1579 = vmatpush1.xpose.msra.mxu0 0.0
        %1580 = vmatprep.subr.mxu0 0.0
        %1581 = vmatpush1.xpose.msra.mxu0 0.0
        %1582 = vmatprep.subr.mxu0 0.0
        %1583 = vmatpush1.xpose.msra.mxu0 0.0
        %1584 = vmatprep.subr.mxu0 0.0
        %1585 = vmatpush1.xpose.msra.mxu0 0.0
        %1586 = vmatprep.subr.mxu0 0.0
        %1587 = vmatpush1.xpose.msra.mxu0 0.0
        %1588 = vmatprep.subr.mxu0 0.0
        %1589 = vmatpush1.xpose.msra.mxu0 0.0
        %1590 = vmatprep.subr.mxu0 0.0
        %1591 = vmatpush1.xpose.msra.mxu0 0.0
        %1592 = vmatprep.subr.mxu0 0.0
        %1593 = vmatpush1.xpose.msra.mxu0 0.0
        %1594 = vmatprep.mubr.f32.mxu0 0.0
        %1595 = vmatmul.mubr.f32.gmra.mrb[0].mxu0 %v1525
        %v1596 = vpop.f32.mrb[0].mxu0
        %v1597 = vadd.f32 0.0, %v1596
        %v1598 = vpop.f32.mrb[0].mxu0
        %1599 = vdwg.mxu0
        %v1601 = vsel %vm1447, %v1445, 0
        %v1604 = vsel %vm1447, %v1090, 0
        %1606 = vmatprep.subr.mxu0 0.0
        %1607 = vmatpush1.xpose.msra.mxu0 %v1604
        %1608 = vmatprep.subr.mxu0 0.0
        %1609 = vmatpush1.xpose.msra.mxu0 0.0
        %1610 = vmatprep.subr.mxu0 0.0
        %1611 = vmatpush1.xpose.msra.mxu0 0.0
        %1612 = vmatprep.subr.mxu0 0.0
        %1613 = vmatpush1.xpose.msra.mxu0 0.0
        %1614 = vmatprep.subr.mxu0 0.0
        %1615 = vmatpush1.xpose.msra.mxu0 0.0
        %1616 = vmatprep.subr.mxu0 0.0
        %1617 = vmatpush1.xpose.msra.mxu0 0.0
        %1618 = vmatprep.subr.mxu0 0.0
        %1619 = vmatpush1.xpose.msra.mxu0 0.0
        %1620 = vmatprep.subr.mxu0 0.0
        %1621 = vmatpush1.xpose.msra.mxu0 0.0
        %1622 = vmatprep.subr.mxu0 0.0
        %1623 = vmatpush1.xpose.msra.mxu0 0.0
        %1624 = vmatprep.subr.mxu0 0.0
        %1625 = vmatpush1.xpose.msra.mxu0 0.0
        %1626 = vmatprep.subr.mxu0 0.0
        %1627 = vmatpush1.xpose.msra.mxu0 0.0
        %1628 = vmatprep.subr.mxu0 0.0
        %1629 = vmatpush1.xpose.msra.mxu0 0.0
        %1630 = vmatprep.subr.mxu0 0.0
        %1631 = vmatpush1.xpose.msra.mxu0 0.0
        %1632 = vmatprep.subr.mxu0 0.0
        %1633 = vmatpush1.xpose.msra.mxu0 0.0
        %1634 = vmatprep.subr.mxu0 0.0
        %1635 = vmatpush1.xpose.msra.mxu0 0.0
        %1636 = vmatprep.subr.mxu0 0.0
        %1637 = vmatpush1.xpose.msra.mxu0 0.0
        %1638 = vmatprep.subr.mxu0 0.0
        %1639 = vmatpush1.xpose.msra.mxu0 0.0
        %1640 = vmatprep.subr.mxu0 0.0
        %1641 = vmatpush1.xpose.msra.mxu0 0.0
        %1642 = vmatprep.subr.mxu0 0.0
        %1643 = vmatpush1.xpose.msra.mxu0 0.0
        %1644 = vmatprep.subr.mxu0 0.0
        %1645 = vmatpush1.xpose.msra.mxu0 0.0
        %1646 = vmatprep.subr.mxu0 0.0
        %1647 = vmatpush1.xpose.msra.mxu0 0.0
        %1648 = vmatprep.subr.mxu0 0.0
        %1649 = vmatpush1.xpose.msra.mxu0 0.0
        %1650 = vmatprep.subr.mxu0 0.0
        %1651 = vmatpush1.xpose.msra.mxu0 0.0
        %1652 = vmatprep.subr.mxu0 0.0
        %1653 = vmatpush1.xpose.msra.mxu0 0.0
        %1654 = vmatprep.subr.mxu0 0.0
        %1655 = vmatpush1.xpose.msra.mxu0 0.0
        %1656 = vmatprep.subr.mxu0 0.0
        %1657 = vmatpush1.xpose.msra.mxu0 0.0
        %1658 = vmatprep.subr.mxu0 0.0
        %1659 = vmatpush1.xpose.msra.mxu0 0.0
        %1660 = vmatprep.subr.mxu0 0.0
        %1661 = vmatpush1.xpose.msra.mxu0 0.0
        %1662 = vmatprep.subr.mxu0 0.0
        %1663 = vmatpush1.xpose.msra.mxu0 0.0
        %1664 = vmatprep.subr.mxu0 0.0
        %1665 = vmatpush1.xpose.msra.mxu0 0.0
        %1666 = vmatprep.subr.mxu0 0.0
        %1667 = vmatpush1.xpose.msra.mxu0 0.0
        %1668 = vmatprep.subr.mxu0 0.0
        %1669 = vmatpush1.xpose.msra.mxu0 0.0
        %1670 = vmatprep.mubr.f32.mxu0 0.0
        %1671 = vmatmul.mubr.f32.gmra.mrb[0].mxu0 %v1601
        %v1672 = vpop.f32.mrb[0].mxu0
        %v1673 = vadd.f32 0.0, %v1672
        %v1674 = vpop.f32.mrb[0].mxu0
        %1675 = vdwg.mxu0
        %v1677 = vsel %vm1447, %v1446, 0
        %v1680 = vsel %vm1447, %v1160, 0
        %1682 = vmatprep.subr.mxu0 0.0
        %1683 = vmatpush1.xpose.msra.mxu0 %v1680
        %1684 = vmatprep.subr.mxu0 0.0
        %1685 = vmatpush1.xpose.msra.mxu0 0.0
        %1686 = vmatprep.subr.mxu0 0.0
        %1687 = vmatpush1.xpose.msra.mxu0 0.0
        %1688 = vmatprep.subr.mxu0 0.0
        %1689 = vmatpush1.xpose.msra.mxu0 0.0
        %1690 = vmatprep.subr.mxu0 0.0
        %1691 = vmatpush1.xpose.msra.mxu0 0.0
        %1692 = vmatprep.subr.mxu0 0.0
        %1693 = vmatpush1.xpose.msra.mxu0 0.0
        %1694 = vmatprep.subr.mxu0 0.0
        %1695 = vmatpush1.xpose.msra.mxu0 0.0
        %1696 = vmatprep.subr.mxu0 0.0
        %1697 = vmatpush1.xpose.msra.mxu0 0.0
        %1698 = vmatprep.subr.mxu0 0.0
        %1699 = vmatpush1.xpose.msra.mxu0 0.0
        %1700 = vmatprep.subr.mxu0 0.0
        %1701 = vmatpush1.xpose.msra.mxu0 0.0
        %1702 = vmatprep.subr.mxu0 0.0
        %1703 = vmatpush1.xpose.msra.mxu0 0.0
        %1704 = vmatprep.subr.mxu0 0.0
        %1705 = vmatpush1.xpose.msra.mxu0 0.0
        %1706 = vmatprep.subr.mxu0 0.0
        %1707 = vmatpush1.xpose.msra.mxu0 0.0
        %1708 = vmatprep.subr.mxu0 0.0
        %1709 = vmatpush1.xpose.msra.mxu0 0.0
        %1710 = vmatprep.subr.mxu0 0.0
        %1711 = vmatpush1.xpose.msra.mxu0 0.0
        %1712 = vmatprep.subr.mxu0 0.0
        %1713 = vmatpush1.xpose.msra.mxu0 0.0
        %1714 = vmatprep.subr.mxu0 0.0
        %1715 = vmatpush1.xpose.msra.mxu0 0.0
        %1716 = vmatprep.subr.mxu0 0.0
        %1717 = vmatpush1.xpose.msra.mxu0 0.0
        %1718 = vmatprep.subr.mxu0 0.0
        %1719 = vmatpush1.xpose.msra.mxu0 0.0
        %1720 = vmatprep.subr.mxu0 0.0
        %1721 = vmatpush1.xpose.msra.mxu0 0.0
        %1722 = vmatprep.subr.mxu0 0.0
        %1723 = vmatpush1.xpose.msra.mxu0 0.0
        %1724 = vmatprep.subr.mxu0 0.0
        %1725 = vmatpush1.xpose.msra.mxu0 0.0
        %1726 = vmatprep.subr.mxu0 0.0
        %1727 = vmatpush1.xpose.msra.mxu0 0.0
        %1728 = vmatprep.subr.mxu0 0.0
        %1729 = vmatpush1.xpose.msra.mxu0 0.0
        %1730 = vmatprep.subr.mxu0 0.0
        %1731 = vmatpush1.xpose.msra.mxu0 0.0
        %1732 = vmatprep.subr.mxu0 0.0
        %1733 = vmatpush1.xpose.msra.mxu0 0.0
        %1734 = vmatprep.subr.mxu0 0.0
        %1735 = vmatpush1.xpose.msra.mxu0 0.0
        %1736 = vmatprep.subr.mxu0 0.0
        %1737 = vmatpush1.xpose.msra.mxu0 0.0
        %1738 = vmatprep.subr.mxu0 0.0
        %1739 = vmatpush1.xpose.msra.mxu0 0.0
        %1740 = vmatprep.subr.mxu0 0.0
        %1741 = vmatpush1.xpose.msra.mxu0 0.0
        %1742 = vmatprep.subr.mxu0 0.0
        %1743 = vmatpush1.xpose.msra.mxu0 0.0
        %1744 = vmatprep.subr.mxu0 0.0
        %1745 = vmatpush1.xpose.msra.mxu0 0.0
        %1746 = vmatprep.mubr.f32.mxu0 0.0
        %1747 = vmatmul.mubr.f32.gmra.mrb[0].mxu0 %v1677
        %v1748 = vpop.f32.mrb[0].mxu0
        %v1749 = vadd.f32 0.0, %v1748
        %v1750 = vpop.f32.mrb[0].mxu0
        %1751 = vdwg.mxu0
        %v1752 = vlaneseq
        %v1753 = vshrl.u32 %v1752, 7
        %v1754 = vlaneseq
        %v1755 = vand.u32 %v1754, 127
        %vm1756 = vcmp.le.s32.totalorder %v1755, %v1753
        %v1757 = vsel %vm1756, 1, 0
        %vm1758 = vcmp.eq.s32.totalorder %v1757, 1
        %v1759 = vsel %vm1758, %v1521, -1e+30
        %v1760 = vsel %vm1758, %v1597, -1e+30
        %v1761 = vsel %vm1758, %v1673, -1e+30
        %v1762 = vsel %vm1758, %v1749, -1e+30
        %v1763 = vsel %vm1447, %v1759, -inf
        %1764 = vmax.xlane.f32.xlu0 %v1763
        %v1765 = vpop.xlane.xlu0 %1764
        %v1766 = vsel %vm1447, %v1760, -inf
        %1767 = vmax.xlane.f32.xlu0 %v1766
        %v1768 = vpop.xlane.xlu0 %1767
        %v1769 = vsel %vm1447, %v1761, -inf
        %1770 = vmax.xlane.f32.xlu0 %v1769
        %v1771 = vpop.xlane.xlu0 %1770
        %v1772 = vsel %vm1447, %v1762, -inf
        %1773 = vmax.xlane.f32.xlu0 %v1772
        %v1774 = vpop.xlane.xlu0 %1773
        %v1775 = vsub.f32 %v1759, %v1765
        %v1776 = vsub.f32 %v1760, %v1768
        %v1777 = vsub.f32 %v1761, %v1771
        %v1778 = vsub.f32 %v1762, %v1774
        %v1779 = vmul.f32 %v1775, 1.442695
        %v1780 = vpow.pop %v1779
        %v1781 = vmul.f32 %v1776, 1.442695
        %v1782 = vpow.pop %v1781
        %v1783 = vmul.f32 %v1777, 1.442695
        %v1784 = vpow.pop %v1783
        %v1785 = vmul.f32 %v1778, 1.442695
        %v1786 = vpow.pop %v1785
        %v1787 = vsel %vm1447, %v1780, 0.0
        %1788 = vadd.xlane.f32.xlu0 %v1787
        %v1789 = vpop.xlane.xlu0 %1788
        %v1790 = vsel %vm1447, %v1782, 0.0
        %1791 = vadd.xlane.f32.xlu0 %v1790
        %v1792 = vpop.xlane.xlu0 %1791
        %v1793 = vsel %vm1447, %v1784, 0.0
        %1794 = vadd.xlane.f32.xlu0 %v1793
        %v1795 = vpop.xlane.xlu0 %1794
        %v1796 = vsel %vm1447, %v1786, 0.0
        %1797 = vadd.xlane.f32.xlu0 %v1796
        %v1798 = vpop.xlane.xlu0 %1797
        %v1799 = vrcp.pop %v1789
        %v1800 = vrcp.pop %v1792
        %v1801 = vrcp.pop %v1795
        %v1802 = vrcp.pop %v1798
        %v1803 = vmul.f32 %v1780, %v1799
        %v1804 = vmul.f32 %v1782, %v1800
        %v1805 = vmul.f32 %v1784, %v1801
        %v1806 = vmul.f32 %v1786, %v1802
        %v1808 = vsel %vm1447, %v1803, 0
        %1810 = vmatprep.subr.mxu0 0.0
        %1811 = vmatpush1.msra.mxu0 %v1230
        %1812 = vmatprep.subr.mxu0 0.0
        %1813 = vmatpush1.msra.mxu0 0.0
        %1814 = vmatprep.subr.mxu0 0.0
        %1815 = vmatpush1.msra.mxu0 0.0
        %1816 = vmatprep.subr.mxu0 0.0
        %1817 = vmatpush1.msra.mxu0 0.0
        %1818 = vmatprep.subr.mxu0 0.0
        %1819 = vmatpush1.msra.mxu0 0.0
        %1820 = vmatprep.subr.mxu0 0.0
        %1821 = vmatpush1.msra.mxu0 0.0
        %1822 = vmatprep.subr.mxu0 0.0
        %1823 = vmatpush1.msra.mxu0 0.0
        %1824 = vmatprep.subr.mxu0 0.0
        %1825 = vmatpush1.msra.mxu0 0.0
        %1826 = vmatprep.subr.mxu0 0.0
        %1827 = vmatpush1.msra.mxu0 0.0
        %1828 = vmatprep.subr.mxu0 0.0
        %1829 = vmatpush1.msra.mxu0 0.0
        %1830 = vmatprep.subr.mxu0 0.0
        %1831 = vmatpush1.msra.mxu0 0.0
        %1832 = vmatprep.subr.mxu0 0.0
        %1833 = vmatpush1.msra.mxu0 0.0
        %1834 = vmatprep.subr.mxu0 0.0
        %1835 = vmatpush1.msra.mxu0 0.0
        %1836 = vmatprep.subr.mxu0 0.0
        %1837 = vmatpush1.msra.mxu0 0.0
        %1838 = vmatprep.subr.mxu0 0.0
        %1839 = vmatpush1.msra.mxu0 0.0
        %1840 = vmatprep.subr.mxu0 0.0
        %1841 = vmatpush1.msra.mxu0 0.0
        %1842 = vmatprep.subr.mxu0 0.0
        %1843 = vmatpush1.msra.mxu0 0.0
        %1844 = vmatprep.subr.mxu0 0.0
        %1845 = vmatpush1.msra.mxu0 0.0
        %1846 = vmatprep.subr.mxu0 0.0
        %1847 = vmatpush1.msra.mxu0 0.0
        %1848 = vmatprep.subr.mxu0 0.0
        %1849 = vmatpush1.msra.mxu0 0.0
        %1850 = vmatprep.subr.mxu0 0.0
        %1851 = vmatpush1.msra.mxu0 0.0
        %1852 = vmatprep.subr.mxu0 0.0
        %1853 = vmatpush1.msra.mxu0 0.0
        %1854 = vmatprep.subr.mxu0 0.0
        %1855 = vmatpush1.msra.mxu0 0.0
        %1856 = vmatprep.subr.mxu0 0.0
        %1857 = vmatpush1.msra.mxu0 0.0
        %1858 = vmatprep.subr.mxu0 0.0
        %1859 = vmatpush1.msra.mxu0 0.0
        %1860 = vmatprep.subr.mxu0 0.0
        %1861 = vmatpush1.msra.mxu0 0.0
        %1862 = vmatprep.subr.mxu0 0.0
        %1863 = vmatpush1.msra.mxu0 0.0
        %1864 = vmatprep.subr.mxu0 0.0
        %1865 = vmatpush1.msra.mxu0 0.0
        %1866 = vmatprep.subr.mxu0 0.0
        %1867 = vmatpush1.msra.mxu0 0.0
        %1868 = vmatprep.subr.mxu0 0.0
        %1869 = vmatpush1.msra.mxu0 0.0
        %1870 = vmatprep.subr.mxu0 0.0
        %1871 = vmatpush1.msra.mxu0 0.0
        %1872 = vmatprep.subr.mxu0 0.0
        %1873 = vmatpush1.msra.mxu0 0.0
        %1874 = vmatprep.mubr.f32.mxu0 0.0
        %1875 = vmatmul.mubr.f32.gmra.mrb[0].mxu0 %v1808
        %v1876 = vpop.f32.mrb[0].mxu0
        %v1877 = vadd.f32 0.0, %v1876
        %v1878 = vpop.f32.mrb[0].mxu0
        %1879 = vdwg.mxu0
        %v1881 = vsel %vm1447, %v1804, 0
        %1883 = vmatprep.subr.mxu0 0.0
        %1884 = vmatpush1.msra.mxu0 %v1300
        %1885 = vmatprep.subr.mxu0 0.0
        %1886 = vmatpush1.msra.mxu0 0.0
        %1887 = vmatprep.subr.mxu0 0.0
        %1888 = vmatpush1.msra.mxu0 0.0
        %1889 = vmatprep.subr.mxu0 0.0
        %1890 = vmatpush1.msra.mxu0 0.0
        %1891 = vmatprep.subr.mxu0 0.0
        %1892 = vmatpush1.msra.mxu0 0.0
        %1893 = vmatprep.subr.mxu0 0.0
        %1894 = vmatpush1.msra.mxu0 0.0
        %1895 = vmatprep.subr.mxu0 0.0
        %1896 = vmatpush1.msra.mxu0 0.0
        %1897 = vmatprep.subr.mxu0 0.0
        %1898 = vmatpush1.msra.mxu0 0.0
        %1899 = vmatprep.subr.mxu0 0.0
        %1900 = vmatpush1.msra.mxu0 0.0
        %1901 = vmatprep.subr.mxu0 0.0
        %1902 = vmatpush1.msra.mxu0 0.0
        %1903 = vmatprep.subr.mxu0 0.0
        %1904 = vmatpush1.msra.mxu0 0.0
        %1905 = vmatprep.subr.mxu0 0.0
        %1906 = vmatpush1.msra.mxu0 0.0
        %1907 = vmatprep.subr.mxu0 0.0
        %1908 = vmatpush1.msra.mxu0 0.0
        %1909 = vmatprep.subr.mxu0 0.0
        %1910 = vmatpush1.msra.mxu0 0.0
        %1911 = vmatprep.subr.mxu0 0.0
        %1912 = vmatpush1.msra.mxu0 0.0
        %1913 = vmatprep.subr.mxu0 0.0
        %1914 = vmatpush1.msra.mxu0 0.0
        %1915 = vmatprep.subr.mxu0 0.0
        %1916 = vmatpush1.msra.mxu0 0.0
        %1917 = vmatprep.subr.mxu0 0.0
        %1918 = vmatpush1.msra.mxu0 0.0
        %1919 = vmatprep.subr.mxu0 0.0
        %1920 = vmatpush1.msra.mxu0 0.0
        %1921 = vmatprep.subr.mxu0 0.0
        %1922 = vmatpush1.msra.mxu0 0.0
        %1923 = vmatprep.subr.mxu0 0.0
        %1924 = vmatpush1.msra.mxu0 0.0
        %1925 = vmatprep.subr.mxu0 0.0
        %1926 = vmatpush1.msra.mxu0 0.0
        %1927 = vmatprep.subr.mxu0 0.0
        %1928 = vmatpush1.msra.mxu0 0.0
        %1929 = vmatprep.subr.mxu0 0.0
        %1930 = vmatpush1.msra.mxu0 0.0
        %1931 = vmatprep.subr.mxu0 0.0
        %1932 = vmatpush1.msra.mxu0 0.0
        %1933 = vmatprep.subr.mxu0 0.0
        %1934 = vmatpush1.msra.mxu0 0.0
        %1935 = vmatprep.subr.mxu0 0.0
        %1936 = vmatpush1.msra.mxu0 0.0
        %1937 = vmatprep.subr.mxu0 0.0
        %1938 = vmatpush1.msra.mxu0 0.0
        %1939 = vmatprep.subr.mxu0 0.0
        %1940 = vmatpush1.msra.mxu0 0.0
        %1941 = vmatprep.subr.mxu0 0.0
        %1942 = vmatpush1.msra.mxu0 0.0
        %1943 = vmatprep.subr.mxu0 0.0
        %1944 = vmatpush1.msra.mxu0 0.0
        %1945 = vmatprep.subr.mxu0 0.0
        %1946 = vmatpush1.msra.mxu0 0.0
        %1947 = vmatprep.mubr.f32.mxu0 0.0
        %1948 = vmatmul.mubr.f32.gmra.mrb[0].mxu0 %v1881
        %v1949 = vpop.f32.mrb[0].mxu0
        %v1950 = vadd.f32 0.0, %v1949
        %v1951 = vpop.f32.mrb[0].mxu0
        %1952 = vdwg.mxu0
        %v1954 = vsel %vm1447, %v1805, 0
        %1956 = vmatprep.subr.mxu0 0.0
        %1957 = vmatpush1.msra.mxu0 %v1370
        %1958 = vmatprep.subr.mxu0 0.0
        %1959 = vmatpush1.msra.mxu0 0.0
        %1960 = vmatprep.subr.mxu0 0.0
        %1961 = vmatpush1.msra.mxu0 0.0
        %1962 = vmatprep.subr.mxu0 0.0
        %1963 = vmatpush1.msra.mxu0 0.0
        %1964 = vmatprep.subr.mxu0 0.0
        %1965 = vmatpush1.msra.mxu0 0.0
        %1966 = vmatprep.subr.mxu0 0.0
        %1967 = vmatpush1.msra.mxu0 0.0
        %1968 = vmatprep.subr.mxu0 0.0
        %1969 = vmatpush1.msra.mxu0 0.0
        %1970 = vmatprep.subr.mxu0 0.0
        %1971 = vmatpush1.msra.mxu0 0.0
        %1972 = vmatprep.subr.mxu0 0.0
        %1973 = vmatpush1.msra.mxu0 0.0
        %1974 = vmatprep.subr.mxu0 0.0
        %1975 = vmatpush1.msra.mxu0 0.0
        %1976 = vmatprep.subr.mxu0 0.0
        %1977 = vmatpush1.msra.mxu0 0.0
        %1978 = vmatprep.subr.mxu0 0.0
        %1979 = vmatpush1.msra.mxu0 0.0
        %1980 = vmatprep.subr.mxu0 0.0
        %1981 = vmatpush1.msra.mxu0 0.0
        %1982 = vmatprep.subr.mxu0 0.0
        %1983 = vmatpush1.msra.mxu0 0.0
        %1984 = vmatprep.subr.mxu0 0.0
        %1985 = vmatpush1.msra.mxu0 0.0
        %1986 = vmatprep.subr.mxu0 0.0
        %1987 = vmatpush1.msra.mxu0 0.0
        %1988 = vmatprep.subr.mxu0 0.0
        %1989 = vmatpush1.msra.mxu0 0.0
        %1990 = vmatprep.subr.mxu0 0.0
        %1991 = vmatpush1.msra.mxu0 0.0
        %1992 = vmatprep.subr.mxu0 0.0
        %1993 = vmatpush1.msra.mxu0 0.0
        %1994 = vmatprep.subr.mxu0 0.0
        %1995 = vmatpush1.msra.mxu0 0.0
        %1996 = vmatprep.subr.mxu0 0.0
        %1997 = vmatpush1.msra.mxu0 0.0
        %1998 = vmatprep.subr.mxu0 0.0
        %1999 = vmatpush1.msra.mxu0 0.0
        %2000 = vmatprep.subr.mxu0 0.0
        %2001 = vmatpush1.msra.mxu0 0.0
        %2002 = vmatprep.subr.mxu0 0.0
        %2003 = vmatpush1.msra.mxu0 0.0
        %2004 = vmatprep.subr.mxu0 0.0
        %2005 = vmatpush1.msra.mxu0 0.0
        %2006 = vmatprep.subr.mxu0 0.0
        %2007 = vmatpush1.msra.mxu0 0.0
        %2008 = vmatprep.subr.mxu0 0.0
        %2009 = vmatpush1.msra.mxu0 0.0
        %2010 = vmatprep.subr.mxu0 0.0
        %2011 = vmatpush1.msra.mxu0 0.0
        %2012 = vmatprep.subr.mxu0 0.0
        %2013 = vmatpush1.msra.mxu0 0.0
        %2014 = vmatprep.subr.mxu0 0.0
        %2015 = vmatpush1.msra.mxu0 0.0
        %2016 = vmatprep.subr.mxu0 0.0
        %2017 = vmatpush1.msra.mxu0 0.0
        %2018 = vmatprep.subr.mxu0 0.0
        %2019 = vmatpush1.msra.mxu0 0.0
        %2020 = vmatprep.mubr.f32.mxu0 0.0
        %2021 = vmatmul.mubr.f32.gmra.mrb[0].mxu0 %v1954
        %v2022 = vpop.f32.mrb[0].mxu0
        %v2023 = vadd.f32 0.0, %v2022
        %v2024 = vpop.f32.mrb[0].mxu0
        %2025 = vdwg.mxu0
        %v2027 = vsel %vm1447, %v1806, 0
        %2029 = vmatprep.subr.mxu0 0.0
        %2030 = vmatpush1.msra.mxu0 %v1440
        %2031 = vmatprep.subr.mxu0 0.0
        %2032 = vmatpush1.msra.mxu0 0.0
        %2033 = vmatprep.subr.mxu0 0.0
        %2034 = vmatpush1.msra.mxu0 0.0
        %2035 = vmatprep.subr.mxu0 0.0
        %2036 = vmatpush1.msra.mxu0 0.0
        %2037 = vmatprep.subr.mxu0 0.0
        %2038 = vmatpush1.msra.mxu0 0.0
        %2039 = vmatprep.subr.mxu0 0.0
        %2040 = vmatpush1.msra.mxu0 0.0
        %2041 = vmatprep.subr.mxu0 0.0
        %2042 = vmatpush1.msra.mxu0 0.0
        %2043 = vmatprep.subr.mxu0 0.0
        %2044 = vmatpush1.msra.mxu0 0.0
        %2045 = vmatprep.subr.mxu0 0.0
        %2046 = vmatpush1.msra.mxu0 0.0
        %2047 = vmatprep.subr.mxu0 0.0
        %2048 = vmatpush1.msra.mxu0 0.0
        %2049 = vmatprep.subr.mxu0 0.0
        %2050 = vmatpush1.msra.mxu0 0.0
        %2051 = vmatprep.subr.mxu0 0.0
        %2052 = vmatpush1.msra.mxu0 0.0
        %2053 = vmatprep.subr.mxu0 0.0
        %2054 = vmatpush1.msra.mxu0 0.0
        %2055 = vmatprep.subr.mxu0 0.0
        %2056 = vmatpush1.msra.mxu0 0.0
        %2057 = vmatprep.subr.mxu0 0.0
        %2058 = vmatpush1.msra.mxu0 0.0
        %2059 = vmatprep.subr.mxu0 0.0
        %2060 = vmatpush1.msra.mxu0 0.0
        %2061 = vmatprep.subr.mxu0 0.0
        %2062 = vmatpush1.msra.mxu0 0.0
        %2063 = vmatprep.subr.mxu0 0.0
        %2064 = vmatpush1.msra.mxu0 0.0
        %2065 = vmatprep.subr.mxu0 0.0
        %2066 = vmatpush1.msra.mxu0 0.0
        %2067 = vmatprep.subr.mxu0 0.0
        %2068 = vmatpush1.msra.mxu0 0.0
        %2069 = vmatprep.subr.mxu0 0.0
        %2070 = vmatpush1.msra.mxu0 0.0
        %2071 = vmatprep.subr.mxu0 0.0
        %2072 = vmatpush1.msra.mxu0 0.0
        %2073 = vmatprep.subr.mxu0 0.0
        %2074 = vmatpush1.msra.mxu0 0.0
        %2075 = vmatprep.subr.mxu0 0.0
        %2076 = vmatpush1.msra.mxu0 0.0
        %2077 = vmatprep.subr.mxu0 0.0
        %2078 = vmatpush1.msra.mxu0 0.0
        %2079 = vmatprep.subr.mxu0 0.0
        %2080 = vmatpush1.msra.mxu0 0.0
        %2081 = vmatprep.subr.mxu0 0.0
        %2082 = vmatpush1.msra.mxu0 0.0
        %2083 = vmatprep.subr.mxu0 0.0
        %2084 = vmatpush1.msra.mxu0 0.0
        %2085 = vmatprep.subr.mxu0 0.0
        %2086 = vmatpush1.msra.mxu0 0.0
        %2087 = vmatprep.subr.mxu0 0.0
        %2088 = vmatpush1.msra.mxu0 0.0
        %2089 = vmatprep.subr.mxu0 0.0
        %2090 = vmatpush1.msra.mxu0 0.0
        %2091 = vmatprep.subr.mxu0 0.0
        %2092 = vmatpush1.msra.mxu0 0.0
        %2093 = vmatprep.mubr.f32.mxu0 0.0
        %2094 = vmatmul.mubr.f32.gmra.mrb[0].mxu0 %v2027
        %v2095 = vpop.f32.mrb[0].mxu0
        %v2096 = vadd.f32 0.0, %v2095
        %v2097 = vpop.f32.mrb[0].mxu0
        %2098 = vdwg.mxu0
        %v2099 = vld [vmem:[%s3] sm:$0xff]
        %v2100 = vld [vmem:[%s3 + $0x8] sm:$0xff]
        %v2101 = vld [vmem:[%s3 + $0x10] sm:$0xff]
        %v2102 = vld [vmem:[%s3 + $0x18] sm:$0xff]
        %v2104 = vsel %vm1447, %v1877, 0
        %2106 = vmatprep.subr.mxu0 0.0
        %2107 = vmatpush1.msra.mxu0 %v2099
        %2108 = vmatprep.subr.mxu0 0.0
        %2109 = vmatpush1.msra.mxu0 0.0
        %2110 = vmatprep.subr.mxu0 0.0
        %2111 = vmatpush1.msra.mxu0 0.0
        %2112 = vmatprep.subr.mxu0 0.0
        %2113 = vmatpush1.msra.mxu0 0.0
        %2114 = vmatprep.subr.mxu0 0.0
        %2115 = vmatpush1.msra.mxu0 0.0
        %2116 = vmatprep.subr.mxu0 0.0
        %2117 = vmatpush1.msra.mxu0 0.0
        %2118 = vmatprep.subr.mxu0 0.0
        %2119 = vmatpush1.msra.mxu0 0.0
        %2120 = vmatprep.subr.mxu0 0.0
        %2121 = vmatpush1.msra.mxu0 0.0
        %2122 = vmatprep.subr.mxu0 0.0
        %2123 = vmatpush1.msra.mxu0 0.0
        %2124 = vmatprep.subr.mxu0 0.0
        %2125 = vmatpush1.msra.mxu0 0.0
        %2126 = vmatprep.subr.mxu0 0.0
        %2127 = vmatpush1.msra.mxu0 0.0
        %2128 = vmatprep.subr.mxu0 0.0
        %2129 = vmatpush1.msra.mxu0 0.0
        %2130 = vmatprep.subr.mxu0 0.0
        %2131 = vmatpush1.msra.mxu0 0.0
        %2132 = vmatprep.subr.mxu0 0.0
        %2133 = vmatpush1.msra.mxu0 0.0
        %2134 = vmatprep.subr.mxu0 0.0
        %2135 = vmatpush1.msra.mxu0 0.0
        %2136 = vmatprep.subr.mxu0 0.0
        %2137 = vmatpush1.msra.mxu0 0.0
        %2138 = vmatprep.subr.mxu0 0.0
        %2139 = vmatpush1.msra.mxu0 0.0
        %2140 = vmatprep.subr.mxu0 0.0
        %2141 = vmatpush1.msra.mxu0 0.0
        %2142 = vmatprep.subr.mxu0 0.0
        %2143 = vmatpush1.msra.mxu0 0.0
        %2144 = vmatprep.subr.mxu0 0.0
        %2145 = vmatpush1.msra.mxu0 0.0
        %2146 = vmatprep.subr.mxu0 0.0
        %2147 = vmatpush1.msra.mxu0 0.0
        %2148 = vmatprep.subr.mxu0 0.0
        %2149 = vmatpush1.msra.mxu0 0.0
        %2150 = vmatprep.subr.mxu0 0.0
        %2151 = vmatpush1.msra.mxu0 0.0
        %2152 = vmatprep.subr.mxu0 0.0
        %2153 = vmatpush1.msra.mxu0 0.0
        %2154 = vmatprep.subr.mxu0 0.0
        %2155 = vmatpush1.msra.mxu0 0.0
        %2156 = vmatprep.subr.mxu0 0.0
        %2157 = vmatpush1.msra.mxu0 0.0
        %2158 = vmatprep.subr.mxu0 0.0
        %2159 = vmatpush1.msra.mxu0 0.0
        %2160 = vmatprep.subr.mxu0 0.0
        %2161 = vmatpush1.msra.mxu0 0.0
        %2162 = vmatprep.subr.mxu0 0.0
        %2163 = vmatpush1.msra.mxu0 0.0
        %2164 = vmatprep.subr.mxu0 0.0
        %2165 = vmatpush1.msra.mxu0 0.0
        %2166 = vmatprep.subr.mxu0 0.0
        %2167 = vmatpush1.msra.mxu0 0.0
        %2168 = vmatprep.subr.mxu0 0.0
        %2169 = vmatpush1.msra.mxu0 0.0
        %2170 = vmatprep.mubr.f32.mxu0 0.0
        %2171 = vmatmul.mubr.f32.gmra.mrb[0].mxu0 %v2104
        %v2172 = vpop.f32.mrb[0].mxu0
        %v2173 = vadd.f32 0.0, %v2172
        %v2174 = vpop.f32.mrb[0].mxu0
        %2175 = vdwg.mxu0
        %v2177 = vsel %vm1447, %v1950, 0
        %2179 = vmatprep.subr.mxu0 0.0
        %2180 = vmatpush1.msra.mxu0 %v2100
        %2181 = vmatprep.subr.mxu0 0.0
        %2182 = vmatpush1.msra.mxu0 0.0
        %2183 = vmatprep.subr.mxu0 0.0
        %2184 = vmatpush1.msra.mxu0 0.0
        %2185 = vmatprep.subr.mxu0 0.0
        %2186 = vmatpush1.msra.mxu0 0.0
        %2187 = vmatprep.subr.mxu0 0.0
        %2188 = vmatpush1.msra.mxu0 0.0
        %2189 = vmatprep.subr.mxu0 0.0
        %2190 = vmatpush1.msra.mxu0 0.0
        %2191 = vmatprep.subr.mxu0 0.0
        %2192 = vmatpush1.msra.mxu0 0.0
        %2193 = vmatprep.subr.mxu0 0.0
        %2194 = vmatpush1.msra.mxu0 0.0
        %2195 = vmatprep.subr.mxu0 0.0
        %2196 = vmatpush1.msra.mxu0 0.0
        %2197 = vmatprep.subr.mxu0 0.0
        %2198 = vmatpush1.msra.mxu0 0.0
        %2199 = vmatprep.subr.mxu0 0.0
        %2200 = vmatpush1.msra.mxu0 0.0
        %2201 = vmatprep.subr.mxu0 0.0
        %2202 = vmatpush1.msra.mxu0 0.0
        %2203 = vmatprep.subr.mxu0 0.0
        %2204 = vmatpush1.msra.mxu0 0.0
        %2205 = vmatprep.subr.mxu0 0.0
        %2206 = vmatpush1.msra.mxu0 0.0
        %2207 = vmatprep.subr.mxu0 0.0
        %2208 = vmatpush1.msra.mxu0 0.0
        %2209 = vmatprep.subr.mxu0 0.0
        %2210 = vmatpush1.msra.mxu0 0.0
        %2211 = vmatprep.subr.mxu0 0.0
        %2212 = vmatpush1.msra.mxu0 0.0
        %2213 = vmatprep.subr.mxu0 0.0
        %2214 = vmatpush1.msra.mxu0 0.0
        %2215 = vmatprep.subr.mxu0 0.0
        %2216 = vmatpush1.msra.mxu0 0.0
        %2217 = vmatprep.subr.mxu0 0.0
        %2218 = vmatpush1.msra.mxu0 0.0
        %2219 = vmatprep.subr.mxu0 0.0
        %2220 = vmatpush1.msra.mxu0 0.0
        %2221 = vmatprep.subr.mxu0 0.0
        %2222 = vmatpush1.msra.mxu0 0.0
        %2223 = vmatprep.subr.mxu0 0.0
        %2224 = vmatpush1.msra.mxu0 0.0
        %2225 = vmatprep.subr.mxu0 0.0
        %2226 = vmatpush1.msra.mxu0 0.0
        %2227 = vmatprep.subr.mxu0 0.0
        %2228 = vmatpush1.msra.mxu0 0.0
        %2229 = vmatprep.subr.mxu0 0.0
        %2230 = vmatpush1.msra.mxu0 0.0
        %2231 = vmatprep.subr.mxu0 0.0
        %2232 = vmatpush1.msra.mxu0 0.0
        %2233 = vmatprep.subr.mxu0 0.0
        %2234 = vmatpush1.msra.mxu0 0.0
        %2235 = vmatprep.subr.mxu0 0.0
        %2236 = vmatpush1.msra.mxu0 0.0
        %2237 = vmatprep.subr.mxu0 0.0
        %2238 = vmatpush1.msra.mxu0 0.0
        %2239 = vmatprep.subr.mxu0 0.0
        %2240 = vmatpush1.msra.mxu0 0.0
        %2241 = vmatprep.subr.mxu0 0.0
        %2242 = vmatpush1.msra.mxu0 0.0
        %2243 = vmatprep.mubr.f32.mxu0 0.0
        %2244 = vmatmul.mubr.f32.gmra.mrb[0].mxu0 %v2177
        %v2245 = vpop.f32.mrb[0].mxu0
        %v2246 = vadd.f32 0.0, %v2245
        %v2247 = vpop.f32.mrb[0].mxu0
        %2248 = vdwg.mxu0
        %v2250 = vsel %vm1447, %v2023, 0
        %2252 = vmatprep.subr.mxu0 0.0
        %2253 = vmatpush1.msra.mxu0 %v2101
        %2254 = vmatprep.subr.mxu0 0.0
        %2255 = vmatpush1.msra.mxu0 0.0
        %2256 = vmatprep.subr.mxu0 0.0
        %2257 = vmatpush1.msra.mxu0 0.0
        %2258 = vmatprep.subr.mxu0 0.0
        %2259 = vmatpush1.msra.mxu0 0.0
        %2260 = vmatprep.subr.mxu0 0.0
        %2261 = vmatpush1.msra.mxu0 0.0
        %2262 = vmatprep.subr.mxu0 0.0
        %2263 = vmatpush1.msra.mxu0 0.0
        %2264 = vmatprep.subr.mxu0 0.0
        %2265 = vmatpush1.msra.mxu0 0.0
        %2266 = vmatprep.subr.mxu0 0.0
        %2267 = vmatpush1.msra.mxu0 0.0
        %2268 = vmatprep.subr.mxu0 0.0
        %2269 = vmatpush1.msra.mxu0 0.0
        %2270 = vmatprep.subr.mxu0 0.0
        %2271 = vmatpush1.msra.mxu0 0.0
        %2272 = vmatprep.subr.mxu0 0.0
        %2273 = vmatpush1.msra.mxu0 0.0
        %2274 = vmatprep.subr.mxu0 0.0
        %2275 = vmatpush1.msra.mxu0 0.0
        %2276 = vmatprep.subr.mxu0 0.0
        %2277 = vmatpush1.msra.mxu0 0.0
        %2278 = vmatprep.subr.mxu0 0.0
        %2279 = vmatpush1.msra.mxu0 0.0
        %2280 = vmatprep.subr.mxu0 0.0
        %2281 = vmatpush1.msra.mxu0 0.0
        %2282 = vmatprep.subr.mxu0 0.0
        %2283 = vmatpush1.msra.mxu0 0.0
        %2284 = vmatprep.subr.mxu0 0.0
        %2285 = vmatpush1.msra.mxu0 0.0
        %2286 = vmatprep.subr.mxu0 0.0
        %2287 = vmatpush1.msra.mxu0 0.0
        %2288 = vmatprep.subr.mxu0 0.0
        %2289 = vmatpush1.msra.mxu0 0.0
        %2290 = vmatprep.subr.mxu0 0.0
        %2291 = vmatpush1.msra.mxu0 0.0
        %2292 = vmatprep.subr.mxu0 0.0
        %2293 = vmatpush1.msra.mxu0 0.0
        %2294 = vmatprep.subr.mxu0 0.0
        %2295 = vmatpush1.msra.mxu0 0.0
        %2296 = vmatprep.subr.mxu0 0.0
        %2297 = vmatpush1.msra.mxu0 0.0
        %2298 = vmatprep.subr.mxu0 0.0
        %2299 = vmatpush1.msra.mxu0 0.0
        %2300 = vmatprep.subr.mxu0 0.0
        %2301 = vmatpush1.msra.mxu0 0.0
        %2302 = vmatprep.subr.mxu0 0.0
        %2303 = vmatpush1.msra.mxu0 0.0
        %2304 = vmatprep.subr.mxu0 0.0
        %2305 = vmatpush1.msra.mxu0 0.0
        %2306 = vmatprep.subr.mxu0 0.0
        %2307 = vmatpush1.msra.mxu0 0.0
        %2308 = vmatprep.subr.mxu0 0.0
        %2309 = vmatpush1.msra.mxu0 0.0
        %2310 = vmatprep.subr.mxu0 0.0
        %2311 = vmatpush1.msra.mxu0 0.0
        %2312 = vmatprep.subr.mxu0 0.0
        %2313 = vmatpush1.msra.mxu0 0.0
        %2314 = vmatprep.subr.mxu0 0.0
        %2315 = vmatpush1.msra.mxu0 0.0
        %2316 = vmatprep.mubr.f32.mxu0 0.0
        %2317 = vmatmul.mubr.f32.gmra.mrb[0].mxu0 %v2250
        %v2318 = vpop.f32.mrb[0].mxu0
        %v2319 = vadd.f32 0.0, %v2318
        %v2320 = vpop.f32.mrb[0].mxu0
        %2321 = vdwg.mxu0
        %v2323 = vsel %vm1447, %v2096, 0
        %2325 = vmatprep.subr.mxu0 0.0
        %2326 = vmatpush1.msra.mxu0 %v2102
        %2327 = vmatprep.subr.mxu0 0.0
        %2328 = vmatpush1.msra.mxu0 0.0
        %2329 = vmatprep.subr.mxu0 0.0
        %2330 = vmatpush1.msra.mxu0 0.0
        %2331 = vmatprep.subr.mxu0 0.0
        %2332 = vmatpush1.msra.mxu0 0.0
        %2333 = vmatprep.subr.mxu0 0.0
        %2334 = vmatpush1.msra.mxu0 0.0
        %2335 = vmatprep.subr.mxu0 0.0
        %2336 = vmatpush1.msra.mxu0 0.0
        %2337 = vmatprep.subr.mxu0 0.0
        %2338 = vmatpush1.msra.mxu0 0.0
        %2339 = vmatprep.subr.mxu0 0.0
        %2340 = vmatpush1.msra.mxu0 0.0
        %2341 = vmatprep.subr.mxu0 0.0
        %2342 = vmatpush1.msra.mxu0 0.0
        %2343 = vmatprep.subr.mxu0 0.0
        %2344 = vmatpush1.msra.mxu0 0.0
        %2345 = vmatprep.subr.mxu0 0.0
        %2346 = vmatpush1.msra.mxu0 0.0
        %2347 = vmatprep.subr.mxu0 0.0
        %2348 = vmatpush1.msra.mxu0 0.0
        %2349 = vmatprep.subr.mxu0 0.0
        %2350 = vmatpush1.msra.mxu0 0.0
        %2351 = vmatprep.subr.mxu0 0.0
        %2352 = vmatpush1.msra.mxu0 0.0
        %2353 = vmatprep.subr.mxu0 0.0
        %2354 = vmatpush1.msra.mxu0 0.0
        %2355 = vmatprep.subr.mxu0 0.0
        %2356 = vmatpush1.msra.mxu0 0.0
        %2357 = vmatprep.subr.mxu0 0.0
        %2358 = vmatpush1.msra.mxu0 0.0
        %2359 = vmatprep.subr.mxu0 0.0
        %2360 = vmatpush1.msra.mxu0 0.0
        %2361 = vmatprep.subr.mxu0 0.0
        %2362 = vmatpush1.msra.mxu0 0.0
        %2363 = vmatprep.subr.mxu0 0.0
        %2364 = vmatpush1.msra.mxu0 0.0
        %2365 = vmatprep.subr.mxu0 0.0
        %2366 = vmatpush1.msra.mxu0 0.0
        %2367 = vmatprep.subr.mxu0 0.0
        %2368 = vmatpush1.msra.mxu0 0.0
        %2369 = vmatprep.subr.mxu0 0.0
        %2370 = vmatpush1.msra.mxu0 0.0
        %2371 = vmatprep.subr.mxu0 0.0
        %2372 = vmatpush1.msra.mxu0 0.0
        %2373 = vmatprep.subr.mxu0 0.0
        %2374 = vmatpush1.msra.mxu0 0.0
        %2375 = vmatprep.subr.mxu0 0.0
        %2376 = vmatpush1.msra.mxu0 0.0
        %2377 = vmatprep.subr.mxu0 0.0
        %2378 = vmatpush1.msra.mxu0 0.0
        %2379 = vmatprep.subr.mxu0 0.0
        %2380 = vmatpush1.msra.mxu0 0.0
        %2381 = vmatprep.subr.mxu0 0.0
        %2382 = vmatpush1.msra.mxu0 0.0
        %2383 = vmatprep.subr.mxu0 0.0
        %2384 = vmatpush1.msra.mxu0 0.0
        %2385 = vmatprep.subr.mxu0 0.0
        %2386 = vmatpush1.msra.mxu0 0.0
        %2387 = vmatprep.subr.mxu0 0.0
        %2388 = vmatpush1.msra.mxu0 0.0
        %2389 = vmatprep.mubr.f32.mxu0 0.0
        %2390 = vmatmul.mubr.f32.gmra.mrb[0].mxu0 %v2323
        %v2391 = vpop.f32.mrb[0].mxu0
        %v2392 = vadd.f32 0.0, %v2391
        %v2393 = vpop.f32.mrb[0].mxu0
        %2394 = vdwg.mxu0
        %v2395 = vsel %vm439, %v2173, 0.0
        %v2396 = vsel %vm439, %v2246, 0.0
        %v2397 = vadd.f32 %v2395, %v2396
        %v2398 = vsel %vm439, %v2319, 0.0
        %v2399 = vadd.f32 %v2397, %v2398
        %v2400 = vsel %vm439, %v2392, 0.0
        %v2401 = vadd.f32 %v2399, %v2400
        %v2402 = vld [vmem:[%s4] sm:$0x1]
        %v2404 = vlaneseq
        %v2405 = vshrl.u32 %v2404, 7
        %v2406 = vsub.s32 0, %v2405
        %v2407 = vrot.slane %v2402, %v2406
        %v2409 = vadd.f32 %v2401, %v2407
        %v2410 = vadd.f32 %v467, %v2409
        %v2411 = vld [vmem:[%s7] sm:$0x1]
        %v2412 = vld [vmem:[%s8] sm:$0x1]
        %v2413 = vsel %vm439, %v2410, 0.0
        %2414 = vadd.xlane.f32.xlu0 %v2413
        %v2415 = vpop.xlane.xlu0 %2414
        %v2416 = vmul.f32 %v2415, %v443
        %v2417 = vsub.f32 %v2410, %v2416
        %v2418 = vmul.f32 %v2417, %v2417
        %v2419 = vsel %vm439, %v2418, 0.0
        %2420 = vadd.xlane.f32.xlu0 %v2419
        %v2421 = vpop.xlane.xlu0 %2420
        %v2422 = vmul.f32 %v2421, %v443
        %v2423 = vadd.f32 %v2422, 1e-05
        %v2424 = vrsqrt.pop %v2423
        %v2425 = vmul.f32 %v2417, %v2424
        %v2427 = vlaneseq
        %v2428 = vshrl.u32 %v2427, 7
        %v2429 = vsub.s32 0, %v2428
        %v2430 = vrot.slane %v2411, %v2429
        %v2432 = vmul.f32 %v2425, %v2430
        %v2434 = vlaneseq
        %v2435 = vshrl.u32 %v2434, 7
        %v2436 = vsub.s32 0, %v2435
        %v2437 = vrot.slane %v2412, %v2436
        %v2439 = vadd.f32 %v2432, %v2437
        %v2440 = vld [vmem:[%s9] sm:$0xff]
        %v2441 = vld [vmem:[%s9 + $0x8] sm:$0xff]
        %v2442 = vld [vmem:[%s9 + $0x10] sm:$0xff]
        %v2443 = vld [vmem:[%s9 + $0x18] sm:$0xff]
        %v2444 = vld [vmem:[%s10] sm:$0x1]
        %v2446 = vlaneseq
        %v2447 = vshrl.u32 %v2446, 7
        %v2448 = vsub.s32 0, %v2447
        %v2449 = vrot.slane %v2444, %v2448
        %v2452 = vsel %vm439, %v2439, 0
        %2454 = vmatprep.subr.mxu0 0.0
        %2455 = vmatpush1.msra.mxu0 %v2440
        %2456 = vmatprep.subr.mxu0 0.0
        %2457 = vmatpush1.msra.mxu0 %v2441
        %2458 = vmatprep.subr.mxu0 0.0
        %2459 = vmatpush1.msra.mxu0 %v2442
        %2460 = vmatprep.subr.mxu0 0.0
        %2461 = vmatpush1.msra.mxu0 %v2443
        %2462 = vmatprep.subr.mxu0 0.0
        %2463 = vmatpush1.msra.mxu0 0.0
        %2464 = vmatprep.subr.mxu0 0.0
        %2465 = vmatpush1.msra.mxu0 0.0
        %2466 = vmatprep.subr.mxu0 0.0
        %2467 = vmatpush1.msra.mxu0 0.0
        %2468 = vmatprep.subr.mxu0 0.0
        %2469 = vmatpush1.msra.mxu0 0.0
        %2470 = vmatprep.subr.mxu0 0.0
        %2471 = vmatpush1.msra.mxu0 0.0
        %2472 = vmatprep.subr.mxu0 0.0
        %2473 = vmatpush1.msra.mxu0 0.0
        %2474 = vmatprep.subr.mxu0 0.0
        %2475 = vmatpush1.msra.mxu0 0.0
        %2476 = vmatprep.subr.mxu0 0.0
        %2477 = vmatpush1.msra.mxu0 0.0
        %2478 = vmatprep.subr.mxu0 0.0
        %2479 = vmatpush1.msra.mxu0 0.0
        %2480 = vmatprep.subr.mxu0 0.0
        %2481 = vmatpush1.msra.mxu0 0.0
        %2482 = vmatprep.subr.mxu0 0.0
        %2483 = vmatpush1.msra.mxu0 0.0
        %2484 = vmatprep.subr.mxu0 0.0
        %2485 = vmatpush1.msra.mxu0 0.0
        %2486 = vmatprep.subr.mxu0 0.0
        %2487 = vmatpush1.msra.mxu0 0.0
        %2488 = vmatprep.subr.mxu0 0.0
        %2489 = vmatpush1.msra.mxu0 0.0
        %2490 = vmatprep.subr.mxu0 0.0
        %2491 = vmatpush1.msra.mxu0 0.0
        %2492 = vmatprep.subr.mxu0 0.0
        %2493 = vmatpush1.msra.mxu0 0.0
        %2494 = vmatprep.subr.mxu0 0.0
        %2495 = vmatpush1.msra.mxu0 0.0
        %2496 = vmatprep.subr.mxu0 0.0
        %2497 = vmatpush1.msra.mxu0 0.0
        %2498 = vmatprep.subr.mxu0 0.0
        %2499 = vmatpush1.msra.mxu0 0.0
        %2500 = vmatprep.subr.mxu0 0.0
        %2501 = vmatpush1.msra.mxu0 0.0
        %2502 = vmatprep.subr.mxu0 0.0
        %2503 = vmatpush1.msra.mxu0 0.0
        %2504 = vmatprep.subr.mxu0 0.0
        %2505 = vmatpush1.msra.mxu0 0.0
        %2506 = vmatprep.subr.mxu0 0.0
        %2507 = vmatpush1.msra.mxu0 0.0
        %2508 = vmatprep.subr.mxu0 0.0
        %2509 = vmatpush1.msra.mxu0 0.0
        %2510 = vmatprep.subr.mxu0 0.0
        %2511 = vmatpush1.msra.mxu0 0.0
        %2512 = vmatprep.subr.mxu0 0.0
        %2513 = vmatpush1.msra.mxu0 0.0
        %2514 = vmatprep.subr.mxu0 0.0
        %2515 = vmatpush1.msra.mxu0 0.0
        %2516 = vmatprep.subr.mxu0 0.0
        %2517 = vmatpush1.msra.mxu0 0.0
        %2518 = vmatprep.mubr.f32.mxu0 0.0
        %2519 = vmatmul.mubr.f32.gmra.mrb[0].mxu0 %v2452
        %v2520 = vpop.f32.mrb[0].mxu0
        %v2521 = vadd.f32 %v2449, %v2520
        %v2522 = vpop.f32.mrb[0].mxu0
        %2523 = vdwg.mxu0
        %v2524 = vmax.f32 %v2521, 0.0
        %v2525 = vld [vmem:[%s11] sm:$0xff]
        %v2526 = vld [vmem:[%s11 + $0x8] sm:$0xff]
        %v2527 = vld [vmem:[%s11 + $0x10] sm:$0xff]
        %v2528 = vld [vmem:[%s11 + $0x18] sm:$0xff]
        %v2529 = vld [vmem:[%s11 + $0x20] sm:$0xff]
        %v2530 = vld [vmem:[%s11 + $0x28] sm:$0xff]
        %v2531 = vld [vmem:[%s11 + $0x30] sm:$0xff]
        %v2532 = vld [vmem:[%s11 + $0x38] sm:$0xff]
        %v2533 = vld [vmem:[%s11 + $0x40] sm:$0xff]
        %v2534 = vld [vmem:[%s11 + $0x48] sm:$0xff]
        %v2535 = vld [vmem:[%s11 + $0x50] sm:$0xff]
        %v2536 = vld [vmem:[%s11 + $0x58] sm:$0xff]
        %v2537 = vld [vmem:[%s11 + $0x60] sm:$0xff]
        %v2538 = vld [vmem:[%s11 + $0x68] sm:$0xff]
        %v2539 = vld [vmem:[%s11 + $0x70] sm:$0xff]
        %v2540 = vld [vmem:[%s11 + $0x78] sm:$0xff]
        %v2541 = vld [vmem:[%s12] sm:$0x1]
        %v2543 = vlaneseq
        %v2544 = vshrl.u32 %v2543, 7
        %v2545 = vsub.s32 0, %v2544
        %v2546 = vrot.slane %v2541, %v2545
        %2548 = vmatprep.subr.mxu0 0.0
        %2549 = vmatpush1.msra.mxu0 %v2525
        %2550 = vmatprep.subr.mxu0 0.0
        %2551 = vmatpush1.msra.mxu0 %v2526
        %2552 = vmatprep.subr.mxu0 0.0
        %2553 = vmatpush1.msra.mxu0 %v2527
        %2554 = vmatprep.subr.mxu0 0.0
        %2555 = vmatpush1.msra.mxu0 %v2528
        %2556 = vmatprep.subr.mxu0 0.0
        %2557 = vmatpush1.msra.mxu0 %v2529
        %2558 = vmatprep.subr.mxu0 0.0
        %2559 = vmatpush1.msra.mxu0 %v2530
        %2560 = vmatprep.subr.mxu0 0.0
        %2561 = vmatpush1.msra.mxu0 %v2531
        %2562 = vmatprep.subr.mxu0 0.0
        %2563 = vmatpush1.msra.mxu0 %v2532
        %2564 = vmatprep.subr.mxu0 0.0
        %2565 = vmatpush1.msra.mxu0 %v2533
        %2566 = vmatprep.subr.mxu0 0.0
        %2567 = vmatpush1.msra.mxu0 %v2534
        %2568 = vmatprep.subr.mxu0 0.0
        %2569 = vmatpush1.msra.mxu0 %v2535
        %2570 = vmatprep.subr.mxu0 0.0
        %2571 = vmatpush1.msra.mxu0 %v2536
        %2572 = vmatprep.subr.mxu0 0.0
        %2573 = vmatpush1.msra.mxu0 %v2537
        %2574 = vmatprep.subr.mxu0 0.0
        %2575 = vmatpush1.msra.mxu0 %v2538
        %2576 = vmatprep.subr.mxu0 0.0
        %2577 = vmatpush1.msra.mxu0 %v2539
        %2578 = vmatprep.subr.mxu0 0.0
        %2579 = vmatpush1.msra.mxu0 %v2540
        %2580 = vmatprep.subr.mxu0 0.0
        %2581 = vmatpush1.msra.mxu0 0.0
        %2582 = vmatprep.subr.mxu0 0.0
        %2583 = vmatpush1.msra.mxu0 0.0
        %2584 = vmatprep.subr.mxu0 0.0
        %2585 = vmatpush1.msra.mxu0 0.0
        %2586 = vmatprep.subr.mxu0 0.0
        %2587 = vmatpush1.msra.mxu0 0.0
        %2588 = vmatprep.subr.mxu0 0.0
        %2589 = vmatpush1.msra.mxu0 0.0
        %2590 = vmatprep.subr.mxu0 0.0
        %2591 = vmatpush1.msra.mxu0 0.0
        %2592 = vmatprep.subr.mxu0 0.0
        %2593 = vmatpush1.msra.mxu0 0.0
        %2594 = vmatprep.subr.mxu0 0.0
        %2595 = vmatpush1.msra.mxu0 0.0
        %2596 = vmatprep.subr.mxu0 0.0
        %2597 = vmatpush1.msra.mxu0 0.0
        %2598 = vmatprep.subr.mxu0 0.0
        %2599 = vmatpush1.msra.mxu0 0.0
        %2600 = vmatprep.subr.mxu0 0.0
        %2601 = vmatpush1.msra.mxu0 0.0
        %2602 = vmatprep.subr.mxu0 0.0
        %2603 = vmatpush1.msra.mxu0 0.0
        %2604 = vmatprep.subr.mxu0 0.0
        %2605 = vmatpush1.msra.mxu0 0.0
        %2606 = vmatprep.subr.mxu0 0.0
        %2607 = vmatpush1.msra.mxu0 0.0
        %2608 = vmatprep.subr.mxu0 0.0
        %2609 = vmatpush1.msra.mxu0 0.0
        %2610 = vmatprep.subr.mxu0 0.0
        %2611 = vmatpush1.msra.mxu0 0.0
        %2612 = vmatprep.mubr.f32.mxu0 0.0
        %2613 = vmatmul.mubr.f32.gmra.mrb[0].mxu0 %v2524
        %v2614 = vpop.f32.mrb[0].mxu0
        %v2615 = vadd.f32 %v2546, %v2614
        %v2616 = vpop.f32.mrb[0].mxu0
        %2617 = vdwg.mxu0
        %v2618 = vadd.f32 %v2439, %v2615
        %2619 = vst.msk [vmem:[%s431] sm:$0xff] %vm439, %v2618
        %s2620 = sand.u32 %s313, 1
        %s2621 = scalar_lea.sflag [#allocation3], %s2620
        %s2622 = sand.u32 %s313, 1
        %s2623 = smul.addr %s2622, 8
        %s2624 = scalar_lea.vmem [#allocation2], %s2623
        // Predicated region
        $region73: #{tpu_custom_call.1} parent=71 // pred_check
          %p2625 = pneg %p323
        $region74: #{tpu_custom_call.1} parent=71 // pred_check_branch
          %2627 = sbr.rel (%p2625) target = $region76
        $region75: #{tpu_custom_call.1} parent=71 // pred_region
          %s2629 = ssub.s32 128, 128
          %2630 = vsyncadd %s2621, %s2629
          %s2631 = smul.addr %s27, 128
          %s2632 = scalar_lea.hbm %s13, %s2631
          %s2634 = sshll.u32 %s2624, 4
          %s2635 = int_to_ptr.vmem [resolvable:$true] %s2634
          %2637 = dma.vmem_to_hbm [thread:$0]  %s2635, 128, %s2632, %s2621
        $region76: #{tpu_custom_call.1} parent=71 // pred_fallthru
          _
      $region72: #{tpu_custom_call.1} parent=5 // pred_fallthru
        _
      %p2638 = scmp.le.s32.totalorder 2, %s22
      // Predicated region
      $region77: #{tpu_custom_call.1} parent=5 // pred_check
        %p2639 = pneg %p2638
      $region78: #{tpu_custom_call.1} parent=5 // pred_check_branch
        %2641 = sbr.rel (%p2639) target = $region80
      $region79: #{tpu_custom_call.1} parent=5 // pred_region
        %s2642 = ssub.s32 %s22, 2
        // Predicated region
        $region81: #{tpu_custom_call.1} parent=79 // pred_check
          %p2643 = pneg %p329
        $region82: #{tpu_custom_call.1} parent=79 // pred_check_branch
          %2645 = sbr.rel (%p2643) target = $region84
        $region83: #{tpu_custom_call.1} parent=79 // pred_region
          %s2646 = sand.u32 %s314, 1
          %s2647 = scalar_lea.sflag [#allocation3], %s2646
          %s2648 = sand.u32 %s314, 1
          %s2649 = smul.addr %s2648, 8
          %s2650 = scalar_lea.vmem [#allocation2], %s2649
          %2651 = dma.done %s2647, 128
        $region84: #{tpu_custom_call.1} parent=79 // pred_fallthru
          _
      $region80: #{tpu_custom_call.1} parent=5 // pred_fallthru
        _
    $region6: #{tpu_custom_call.1} parent=1 // loop_footer
      %s26 = sadd.s32 1, %s22
    $region7: #{tpu_custom_call.1} parent=1 // loop_footer_branch
      %21 = sbr.rel target = $region3
    $region8: #{tpu_custom_call.1} parent=1 // loop_exit
      _
    %2652 = vsyncpa [#allocation3], 1
    %s2653 = scalar_lea.sflag [#allocation3], 1
    %2654 = vsyncpa %s2653, 1

</llo_original>
